<compile_context>
chip_gen: v7x
topology: tpu7x:2x2x1
jax: 0.10.0
libtpu: 0.0.40
codegen_flags: <defaults>
</compile_context>

<pallas_src>
import functools

import jax
import jax.numpy as jnp
import numpy as np
from jax.experimental import pallas as pl
from jax.experimental.pallas import tpu as pltpu

EPS = 1e-5                      # PyTorch BatchNorm2d default eps
LANE = 128                      # lane width / MXU alignment


def _round_up(x, m):
    return (x + m - 1) // m * m


def _hw_vmem_bytes():
    try:
        return int(pltpu.get_tpu_info().vmem_capacity_bytes)
    except Exception:
        return 64 * 1024 * 1024  # conservative fallback (v7x per-TC VMEM)


# Leave explicit headroom below physical VMEM (Mosaic internal scratch,
# pipeline buffers): v7x (64 MiB) -> 52 MiB, v5e/v6e (128 MiB) -> 100 MiB.
VMEM_CAP = _hw_vmem_bytes()
VMEM_LIMIT = int(max(32 * 2**20, min(VMEM_CAP - 12 * 2**20, 100 * 2**20)))


def _pick_tile_m(m, k_widths, c_widths, vmem_limit):
    """Largest TILE_M whose double-buffered bf16 blocks fit ~60% of the budget."""
    budget = 0.6 * vmem_limit
    weight_bytes = 2 * sum(k * c for k, c in zip(k_widths, c_widths)) * 2
    per_row = 2 * (sum(k_widths) + sum(c_widths)) * 2
    avail = budget - weight_bytes
    tile = int(avail // per_row) if avail > per_row * 16 else 16
    tile = min(tile, 2048, _round_up(m, 16))
    tile = max((tile // 16) * 16, 16)
    return tile


# ---------------------------------------------------------------------------
# Pallas kernels
# ---------------------------------------------------------------------------
def _matmul_stats_kernel(p_ref, w_ref, y_ref, sum_ref, sq_ref):
    """y = p @ w; write y tile (bf16) and accumulate per-channel sum / sumsq."""
    @pl.when(pl.program_id(1) == 0)
    def _():
        sum_ref[...] = jnp.zeros_like(sum_ref)
        sq_ref[...] = jnp.zeros_like(sq_ref)

    y = jnp.dot(p_ref[...], w_ref[...], preferred_element_type=jnp.float32)
    y_ref[...] = y.astype(y_ref.dtype)
    # Layout-preserving sublane regroup: (tile_m, C) -> (tile_m//8, 8, C).
    yt = y.reshape(-1, 8, y.shape[-1])
    sum_ref[...] += jnp.sum(yt, axis=0)
    sq_ref[...] += jnp.sum(yt * yt, axis=0)


def _pair_matmul_stats_kernel(p_ref, w_ref, q_ref, v_ref,
                              y_ref, s_ref, sum1_ref, sq1_ref, sum2_ref, sq2_ref):
    """Main conv (p@w) + fused 1x1 shortcut conv (q@v): write both + stats."""
    @pl.when(pl.program_id(1) == 0)
    def _():
        for r in (sum1_ref, sq1_ref, sum2_ref, sq2_ref):
            r[...] = jnp.zeros_like(r)

    y = jnp.dot(p_ref[...], w_ref[...], preferred_element_type=jnp.float32)
    s = jnp.dot(q_ref[...], v_ref[...], preferred_element_type=jnp.float32)
    y_ref[...] = y.astype(y_ref.dtype)
    s_ref[...] = s.astype(s_ref.dtype)
    yt = y.reshape(-1, 8, y.shape[-1])
    st = s.reshape(-1, 8, s.shape[-1])
    sum1_ref[...] += jnp.sum(yt, axis=0)
    sq1_ref[...] += jnp.sum(yt * yt, axis=0)
    sum2_ref[...] += jnp.sum(st, axis=0)
    sq2_ref[...] += jnp.sum(st * st, axis=0)


def _bn_relu_kernel(y_ref, scale_ref, bias_ref, o_ref):
    """o = relu(y * scale + bias)  -- matmul-free finalize."""
    y = y_ref[...].astype(jnp.float32)
    o_ref[...] = jnp.maximum(y * scale_ref[...] + bias_ref[...], 0.0).astype(o_ref.dtype)


def _bn_add_relu_kernel(y_ref, scale_ref, bias_ref, r_ref, o_ref):
    """Identity-shortcut finalize: relu(BN(y) + residual)."""
    y = y_ref[...].astype(jnp.float32)
    out = y * scale_ref[...] + bias_ref[...] + r_ref[...].astype(jnp.float32)
    o_ref[...] = jnp.maximum(out, 0.0).astype(o_ref.dtype)


def _bn_pair_add_relu_kernel(y_ref, scale_ref, bias_ref,
                             s_ref, sscale_ref, sbias_ref, o_ref):
    """Projection-shortcut finalize: relu(BN(y) + BN(shortcut))."""
    y = y_ref[...].astype(jnp.float32)
    s = s_ref[...].astype(jnp.float32)
    out = (y * scale_ref[...] + bias_ref[...]) + (s * sscale_ref[...] + sbias_ref[...])
    o_ref[...] = jnp.maximum(out, 0.0).astype(o_ref.dtype)


# ---------------------------------------------------------------------------
# pallas_call wrappers
# ---------------------------------------------------------------------------
def _compiler_params(semantics):
    return pltpu.CompilerParams(dimension_semantics=semantics,
                                vmem_limit_bytes=VMEM_LIMIT)


def matmul_stats(p, w, tile_m, n_split):
    mp, kp = p.shape
    cp = w.shape[1]
    n_i = mp // (n_split * tile_m)
    row = lambda c, i: (c * n_i + i, 0)
    stat = jax.ShapeDtypeStruct((8 * n_split, cp), jnp.float32)
    return pl.pallas_call(
        _matmul_stats_kernel,
        out_shape=(jax.ShapeDtypeStruct((mp, cp), jnp.bfloat16), stat, stat),
        grid=(n_split, n_i),
        in_specs=[pl.BlockSpec((tile_m, kp), row),
                  pl.BlockSpec((kp, cp), lambda c, i: (0, 0))],
        out_specs=(pl.BlockSpec((tile_m, cp), row),
                   pl.BlockSpec((8, cp), lambda c, i: (c, 0)),
                   pl.BlockSpec((8, cp), lambda c, i: (c, 0))),
        compiler_params=_compiler_params(("parallel", "arbitrary")),
    )(p, w)


def pair_matmul_stats(p, w, q, v, tile_m, n_split):
    mp, kp = p.shape
    cp = w.shape[1]
    ksp = q.shape[1]
    n_i = mp // (n_split * tile_m)
    row = lambda c, i: (c * n_i + i, 0)
    ymat = jax.ShapeDtypeStruct((mp, cp), jnp.bfloat16)
    stat = jax.ShapeDtypeStruct((8 * n_split, cp), jnp.float32)
    return pl.pallas_call(
        _pair_matmul_stats_kernel,
        out_shape=(ymat, ymat, stat, stat, stat, stat),
        grid=(n_split, n_i),
        in_specs=[pl.BlockSpec((tile_m, kp), row),
                  pl.BlockSpec((kp, cp), lambda c, i: (0, 0)),
                  pl.BlockSpec((tile_m, ksp), row),
                  pl.BlockSpec((ksp, cp), lambda c, i: (0, 0))],
        out_specs=(pl.BlockSpec((tile_m, cp), row),
                   pl.BlockSpec((tile_m, cp), row),
                   pl.BlockSpec((8, cp), lambda c, i: (c, 0)),
                   pl.BlockSpec((8, cp), lambda c, i: (c, 0)),
                   pl.BlockSpec((8, cp), lambda c, i: (c, 0)),
                   pl.BlockSpec((8, cp), lambda c, i: (c, 0))),
        compiler_params=_compiler_params(("parallel", "arbitrary")),
    )(p, w, q, v)


def bn_relu(y, scale, bias, tile_m, out_dtype):
    mp, cp = y.shape
    row = lambda i: (i, 0)
    const = lambda i: (0, 0)
    return pl.pallas_call(
        _bn_relu_kernel,
        out_shape=jax.ShapeDtypeStruct((mp, cp), out_dtype),
        grid=(mp // tile_m,),
        in_specs=[pl.BlockSpec((tile_m, cp), row),
                  pl.BlockSpec((1, cp), const),
                  pl.BlockSpec((1, cp), const)],
        out_specs=pl.BlockSpec((tile_m, cp), row),
        compiler_params=_compiler_params(("parallel",)),
    )(y, scale, bias)


def bn_add_relu(y, scale, bias, resid, tile_m, out_dtype):
    mp, cp = y.shape
    row = lambda i: (i, 0)
    const = lambda i: (0, 0)
    return pl.pallas_call(
        _bn_add_relu_kernel,
        out_shape=jax.ShapeDtypeStruct((mp, cp), out_dtype),
        grid=(mp // tile_m,),
        in_specs=[pl.BlockSpec((tile_m, cp), row),
                  pl.BlockSpec((1, cp), const),
                  pl.BlockSpec((1, cp), const),
                  pl.BlockSpec((tile_m, cp), row)],
        out_specs=pl.BlockSpec((tile_m, cp), row),
        compiler_params=_compiler_params(("parallel",)),
    )(y, scale, bias, resid)


def bn_pair_add_relu(y, scale, bias, s, sscale, sbias, tile_m, out_dtype):
    mp, cp = y.shape
    row = lambda i: (i, 0)
    const = lambda i: (0, 0)
    return pl.pallas_call(
        _bn_pair_add_relu_kernel,
        out_shape=jax.ShapeDtypeStruct((mp, cp), out_dtype),
        grid=(mp // tile_m,),
        in_specs=[pl.BlockSpec((tile_m, cp), row),
                  pl.BlockSpec((1, cp), const),
                  pl.BlockSpec((1, cp), const),
                  pl.BlockSpec((tile_m, cp), row),
                  pl.BlockSpec((1, cp), const),
                  pl.BlockSpec((1, cp), const)],
        out_specs=pl.BlockSpec((tile_m, cp), row),
        compiler_params=_compiler_params(("parallel",)),
    )(y, scale, bias, s, sscale, sbias)


# ---------------------------------------------------------------------------
# Glue: im2col (layout only), padding, BN folding, block forward
# ---------------------------------------------------------------------------
def _im2col(x, ksize, stride, padding):
    n, h, w, c = x.shape
    if padding:
        x = jnp.pad(x, ((0, 0), (padding, padding), (padding, padding), (0, 0)))
    ho = (h + 2 * padding - ksize) // stride + 1
    wo = (w + 2 * padding - ksize) // stride + 1
    cols = []
    for kh in range(ksize):
        for kw in range(ksize):
            cols.append(x[:, kh:kh + stride * ho:stride,
                          kw:kw + stride * wo:stride, :])
    patches = jnp.concatenate(cols, axis=-1)          # (N, Ho, Wo, k*k*C)
    return patches.reshape(n * ho * wo, ksize * ksize * c), ho, wo


def _pad2d(a, rows, cols, dtype):
    return jnp.pad(a, ((0, rows - a.shape[0]),
                       (0, cols - a.shape[1]))).astype(dtype)


def _fold_bn(s, sq, gamma, beta, count, cp):
    # Combine per-split/per-sublane partial sums, then fold exact training-mode
    # (biased) batch stats into scale/bias.  Padded channels get scale=bias=0.
    s = jnp.sum(s, axis=0)
    sq = jnp.sum(sq, axis=0)
    mean = s / count
    var = jnp.maximum(sq / count - mean * mean, 0.0)   # guard cancellation
    inv = jax.lax.rsqrt(var + EPS)
    g = jnp.pad(gamma, (0, cp - gamma.shape[0]))
    b = jnp.pad(beta, (0, cp - beta.shape[0]))
    scale = (g * inv).reshape(1, cp)
    bias = (b - mean * g * inv).reshape(1, cp)
    return scale.astype(jnp.float32), bias.astype(jnp.float32)


@functools.partial(jax.jit, static_argnames=("stride",))
def basic_block_forward(x_nchw, params, stride):
    # layout: NCHW (PyTorch) -> NHWC internally -> NCHW out.
    x = jnp.transpose(x_nchw, (0, 2, 3, 1)).astype(jnp.float32)
    n, h, w, cin = x.shape
    planes = params["conv1_w"].shape[-1]
    cp = _round_up(planes, LANE)
    k1p = _round_up(9 * cin, LANE)
    k2p = _round_up(9 * planes, LANE)
    ksp = _round_up(cin, LANE)

    ho = (h + 2 - 3) // stride + 1
    wo = (w + 2 - 3) // stride + 1
    m = n * ho * wo

    # Generation-aware tile: sized for the heaviest (conv2 / pair) stats pass.
    if stride != 1:
        tile_m = min(_pick_tile_m(m, (k1p,), (cp,), VMEM_LIMIT),
                     _pick_tile_m(m, (k2p, ksp), (cp, cp), VMEM_LIMIT))
    else:
        tile_m = min(_pick_tile_m(m, (k1p,), (cp,), VMEM_LIMIT),
                     _pick_tile_m(m, (k2p,), (cp,), VMEM_LIMIT))
    n_tiles = _round_up(m, tile_m) // tile_m
    n_split = 2 if n_tiles >= 2 else 1        # split reduction over v7x's 2 TCs
    mp = _round_up(m, n_split * tile_m)

    # ---- conv1 (3x3, stride): matmul+stats, then matmul-free BN+ReLU ------
    p1, _, _ = _im2col(x, 3, stride, 1)
    p1p = _pad2d(p1, mp, k1p, jnp.bfloat16)
    w1p = _pad2d(params["conv1_w"].reshape(9 * cin, planes), k1p, cp, jnp.bfloat16)

    y1, s1, q1 = matmul_stats(p1p, w1p, tile_m, n_split)
    sc1, b1 = _fold_bn(s1, q1, params["bn1_g"], params["bn1_b"], float(m), cp)
    h1 = bn_relu(y1, sc1, b1, tile_m, jnp.bfloat16)

    # ---- conv2 (3x3, stride 1) + bn2 (+ shortcut) + relu ------------------
    # TODO(synk): patch construction still goes through XLA (HBM relayout);
    # in-kernel tap accumulation with halo DMA would remove it entirely.
    h1_img = h1[:m, :planes].reshape(n, ho, wo, planes)
    p2, _, _ = _im2col(h1_img, 3, 1, 1)
    p2p = _pad2d(p2, mp, k2p, jnp.bfloat16)
    w2p = _pad2d(params["conv2_w"].reshape(9 * planes, planes), k2p, cp, jnp.bfloat16)

    if stride != 1:
        # Projection shortcut: 1x1 conv + BN fused into the conv2 passes.
        ps, _, _ = _im2col(x, 1, stride, 0)
        psp = _pad2d(ps, mp, ksp, jnp.bfloat16)
        wsp = _pad2d(params["sc_w"].reshape(cin, planes), ksp, cp, jnp.bfloat16)

        y2, ysc, s2, q2, ss, qs = pair_matmul_stats(p2p, w2p, psp, wsp,
                                                    tile_m, n_split)
        sc2, b2 = _fold_bn(s2, q2, params["bn2_g"], params["bn2_b"], float(m), cp)
        scs, bs = _fold_bn(ss, qs, params["bn_sc_g"], params["bn_sc_b"], float(m), cp)
        out = bn_pair_add_relu(y2, sc2, b2, ysc, scs, bs, tile_m, jnp.float32)
    else:
        # Identity shortcut (requires in_planes == planes, as in PyTorch).
        y2, s2, q2 = matmul_stats(p2p, w2p, tile_m, n_split)
        sc2, b2 = _fold_bn(s2, q2, params["bn2_g"], params["bn2_b"], float(m), cp)
        resid = _pad2d(x.reshape(m, cin), mp, cp, jnp.bfloat16)
        out = bn_add_relu(y2, sc2, b2, resid, tile_m, jnp.float32)

    out_img = out[:m, :planes].reshape(n, ho, wo, planes)
    return jnp.transpose(out_img, (0, 3, 1, 2))       # back to NCHW


# ---------------------------------------------------------------------------
# Pure-JAX reference (correctness check only)
# ---------------------------------------------------------------------------
def _bn_ref(y, g, b):
    mu = jnp.mean(y, axis=(0, 1, 2), keepdims=True)
    var = jnp.mean(jnp.square(y - mu), axis=(0, 1, 2), keepdims=True)
    return (g.reshape(1, 1, 1, -1) * (y - mu) / jnp.sqrt(var + EPS)
            + b.reshape(1, 1, 1, -1))


def _conv_ref(x, w, stride, pad):
    return jax.lax.conv_general_dilated(
        x, w, (stride, stride), [(pad, pad), (pad, pad)],
        dimension_numbers=("NHWC", "HWIO", "NHWC"))


def basic_block_ref(x_nchw, params, stride):
    x = jnp.transpose(x_nchw, (0, 2, 3, 1)).astype(jnp.float32)
    h = jax.nn.relu(_bn_ref(_conv_ref(x, params["conv1_w"], stride, 1),
                            params["bn1_g"], params["bn1_b"]))
    out = _bn_ref(_conv_ref(h, params["conv2_w"], 1, 1),
                  params["bn2_g"], params["bn2_b"])
    if stride != 1:
        sc = _bn_ref(_conv_ref(x, params["sc_w"], stride, 0),
                     params["bn_sc_g"], params["bn_sc_b"])
    else:
        sc = x
    return jnp.transpose(jax.nn.relu(out + sc), (0, 3, 1, 2))


# ---------------------------------------------------------------------------
# Main
# ---------------------------------------------------------------------------
if __name__ == "__main__":
    def make_params(keys, cin, planes, with_shortcut):
        p = {
            "conv1_w": 0.1 * jax.random.normal(keys[0], (3, 3, cin, planes), jnp.float32),
            "bn1_g": 1.0 + 0.1 * jax.random.normal(keys[1], (planes,), jnp.float32),
            "bn1_b": 0.1 * jax.random.normal(keys[2], (planes,), jnp.float32),
            "conv2_w": 0.1 * jax.random.normal(keys[3], (3, 3, planes, planes), jnp.float32),
            "bn2_g": 1.0 + 0.1 * jax.random.normal(keys[4], (planes,), jnp.float32),
            "bn2_b": 0.1 * jax.random.normal(keys[5], (planes,), jnp.float32),
        }
        if with_shortcut:
            p["sc_w"] = 0.1 * jax.random.normal(keys[6], (1, 1, cin, planes), jnp.float32)
            p["bn_sc_g"] = 1.0 + 0.1 * jax.random.normal(keys[7], (planes,), jnp.float32)
            p["bn_sc_b"] = 0.1 * jax.random.normal(keys[8], (planes,), jnp.float32)
        return p

    # Case 1: stride=2 -> projection (1x1 conv + BN) shortcut.
    k = jax.random.split(jax.random.PRNGKey(0), 10)
    x = jax.random.normal(k[9], (2, 4, 16, 16), jnp.float32)
    params = make_params(k, 4, 8, True)
    out = jax.block_until_ready(basic_block_forward(x, params, stride=2))
    ref = jax.block_until_ready(basic_block_ref(x, params, 2))
    assert out.shape == (2, 8, 8, 8), out.shape
    np.testing.assert_allclose(np.asarray(out), np.asarray(ref),
                               rtol=2e-2, atol=2e-2)

    # Case 2: stride=1 -> identity shortcut (in_planes == planes).
    k2 = jax.random.split(jax.random.PRNGKey(1), 10)
    x2 = jax.random.normal(k2[9], (2, 8, 16, 16), jnp.float32)
    params2 = make_params(k2, 8, 8, False)
    out2 = jax.block_until_ready(basic_block_forward(x2, params2, stride=1))
    ref2 = jax.block_until_ready(basic_block_ref(x2, params2, 1))
    assert out2.shape == (2, 8, 16, 16), out2.shape
    np.testing.assert_allclose(np.asarray(out2), np.asarray(ref2),
                               rtol=2e-2, atol=2e-2)

    print("KERNEL_OK")
</pallas_src>

<mosaic_0001>
module attributes {stable_mosaic.version = 11 : i64} {
  func.func @_matmul_stats_kernel(%arg0: i32, %arg1: i32, %arg2: memref<128x128xbf16, #tpu.memory_space<vmem>>, %arg3: memref<128x128xbf16, #tpu.memory_space<vmem>>, %arg4: memref<128x128xbf16, #tpu.memory_space<vmem>>, %arg5: memref<8x128xf32, #tpu.memory_space<vmem>>, %arg6: memref<8x128xf32, #tpu.memory_space<vmem>>) attributes {dimension_semantics = [#tpu.dimension_semantics<parallel>, #tpu.dimension_semantics<arbitrary>], iteration_bounds = array<i64: 1, 1>, scalar_prefetch = 0 : i64, scratch_operands = 0 : i64, tpu.core_type = #tpu.core_type<tc>, window_params = [{transform_indices = @transform_0, window_bounds = array<i64: 128, 128>}, {pipeline_mode = #tpu.pipeline_mode<synchronous>, transform_indices = @transform_1, window_bounds = array<i64: 128, 128>}, {transform_indices = @transform_2, window_bounds = array<i64: 128, 128>}, {transform_indices = @transform_3, window_bounds = array<i64: 8, 128>}, {transform_indices = @transform_4, window_bounds = array<i64: 8, 128>}]} {
    %c0_i32 = arith.constant 0 : i32
    %0 = arith.cmpi eq, %arg1, %c0_i32 : i32
    %1 = arith.extui %0 : i1 to i32
    %c0_i32_0 = arith.constant 0 : i32
    %2 = arith.cmpi ne, %1, %c0_i32_0 : i32
    scf.if %2 {
      %cst_16 = arith.constant 0.000000e+00 : f32
      %18 = vector.broadcast %cst_16 : f32 to vector<8x128xf32>
      %c0_17 = arith.constant 0 : index
      %c0_18 = arith.constant 0 : index
      %19 = vector.load %arg5[%c0_17, %c0_18] : memref<8x128xf32, #tpu.memory_space<vmem>>, vector<8x128xf32>
      tpu.vector_store %arg5[%c0_17, %c0_18], %18 {strides = array<i32>} : memref<8x128xf32, #tpu.memory_space<vmem>>, vector<8x128xf32>,
      %cst_19 = arith.constant 0.000000e+00 : f32
      %20 = vector.broadcast %cst_19 : f32 to vector<8x128xf32>
      %c0_20 = arith.constant 0 : index
      %c0_21 = arith.constant 0 : index
      %21 = vector.load %arg6[%c0_20, %c0_21] : memref<8x128xf32, #tpu.memory_space<vmem>>, vector<8x128xf32>
      tpu.vector_store %arg6[%c0_20, %c0_21], %20 {strides = array<i32>} : memref<8x128xf32, #tpu.memory_space<vmem>>, vector<8x128xf32>,
    } else {
    }
    %c0 = arith.constant 0 : index
    %c0_1 = arith.constant 0 : index
    %3 = vector.load %arg2[%c0, %c0_1] : memref<128x128xbf16, #tpu.memory_space<vmem>>, vector<128x128xbf16>
    %c0_2 = arith.constant 0 : index
    %c0_3 = arith.constant 0 : index
    %4 = vector.load %arg3[%c0_2, %c0_3] : memref<128x128xbf16, #tpu.memory_space<vmem>>, vector<128x128xbf16>
    %cst = arith.constant dense<0.000000e+00> : vector<128x128xf32>
    %5 = tpu.matmul %3, %4, %cst {dimension_numbers = #tpu.dot_dimension_numbers<[1], [0], [0], [1], [0, 0, 1, 1], [], []>} : vector<128x128xbf16>, vector<128x128xbf16>, vector<128x128xf32> -> vector<128x128xf32>
    %6 = arith.truncf %5 : vector<128x128xf32> to vector<128x128xbf16>
    %c0_4 = arith.constant 0 : index
    %c0_5 = arith.constant 0 : index
    %7 = vector.load %arg4[%c0_4, %c0_5] : memref<128x128xbf16, #tpu.memory_space<vmem>>, vector<128x128xbf16>
    tpu.vector_store %arg4[%c0_4, %c0_5], %6 {strides = array<i32>} : memref<128x128xbf16, #tpu.memory_space<vmem>>, vector<128x128xbf16>,
    %8 = vector.shape_cast %5 : vector<128x128xf32> to vector<16x8x128xf32>
    %c0_6 = arith.constant 0 : index
    %c0_7 = arith.constant 0 : index
    %9 = vector.load %arg5[%c0_6, %c0_7] : memref<8x128xf32, #tpu.memory_space<vmem>>, vector<8x128xf32>
    %cst_8 = arith.constant dense<0.000000e+00> : vector<8x128xf32>
    %10 = vector.multi_reduction <add>, %8, %cst_8 [0] : vector<16x8x128xf32> to vector<8x128xf32>
    %11 = arith.addf %9, %10 : vector<8x128xf32>
    %c0_9 = arith.constant 0 : index
    %c0_10 = arith.constant 0 : index
    %12 = vector.load %arg5[%c0_9, %c0_10] : memref<8x128xf32, #tpu.memory_space<vmem>>, vector<8x128xf32>
    tpu.vector_store %arg5[%c0_9, %c0_10], %11 {strides = array<i32>} : memref<8x128xf32, #tpu.memory_space<vmem>>, vector<8x128xf32>,
    %c0_11 = arith.constant 0 : index
    %c0_12 = arith.constant 0 : index
    %13 = vector.load %arg6[%c0_11, %c0_12] : memref<8x128xf32, #tpu.memory_space<vmem>>, vector<8x128xf32>
    %14 = arith.mulf %8, %8 : vector<16x8x128xf32>
    %cst_13 = arith.constant dense<0.000000e+00> : vector<8x128xf32>
    %15 = vector.multi_reduction <add>, %14, %cst_13 [0] : vector<16x8x128xf32> to vector<8x128xf32>
    %16 = arith.addf %13, %15 : vector<8x128xf32>
    %c0_14 = arith.constant 0 : index
    %c0_15 = arith.constant 0 : index
    %17 = vector.load %arg6[%c0_14, %c0_15] : memref<8x128xf32, #tpu.memory_space<vmem>>, vector<8x128xf32>
    tpu.vector_store %arg6[%c0_14, %c0_15], %16 {strides = array<i32>} : memref<8x128xf32, #tpu.memory_space<vmem>>, vector<8x128xf32>,
    return
  }
  func.func @transform_0(%arg0: i32, %arg1: i32) -> (i32, i32) {
    %c1_i32 = arith.constant 1 : i32
    %0 = arith.muli %arg0, %c1_i32 : i32
    %1 = arith.addi %0, %arg1 : i32
    %c0_i32 = arith.constant 0 : i32
    %c0_i32_0 = arith.constant 0 : i32
    return %1, %c0_i32 : i32, i32
  }
  func.func @transform_1(%arg0: i32, %arg1: i32) -> (i32, i32) {
    %c0_i32 = arith.constant 0 : i32
    %c0_i32_0 = arith.constant 0 : i32
    %c0_i32_1 = arith.constant 0 : i32
    return %c0_i32, %c0_i32_0 : i32, i32
  }
  func.func @transform_2(%arg0: i32, %arg1: i32) -> (i32, i32) {
    %c1_i32 = arith.constant 1 : i32
    %0 = arith.muli %arg0, %c1_i32 : i32
    %1 = arith.addi %0, %arg1 : i32
    %c0_i32 = arith.constant 0 : i32
    %c0_i32_0 = arith.constant 0 : i32
    return %1, %c0_i32 : i32, i32
  }
  func.func @transform_3(%arg0: i32, %arg1: i32) -> (i32, i32) {
    %c0_i32 = arith.constant 0 : i32
    %c0_i32_0 = arith.constant 0 : i32
    return %arg0, %c0_i32 : i32, i32
  }
  func.func @transform_4(%arg0: i32, %arg1: i32) -> (i32, i32) {
    %c0_i32 = arith.constant 0 : i32
    %c0_i32_0 = arith.constant 0 : i32
    return %arg0, %c0_i32 : i32, i32
  }
}

module attributes {stable_mosaic.version = 11 : i64} {
  func.func @_bn_relu_kernel(%arg0: i32, %arg1: memref<128x128xbf16, #tpu.memory_space<vmem>>, %arg2: memref<1x128xf32, #tpu.memory_space<vmem>>, %arg3: memref<1x128xf32, #tpu.memory_space<vmem>>, %arg4: memref<128x128xbf16, #tpu.memory_space<vmem>>) attributes {dimension_semantics = [#tpu.dimension_semantics<parallel>], iteration_bounds = array<i64: 1>, scalar_prefetch = 0 : i64, scratch_operands = 0 : i64, tpu.core_type = #tpu.core_type<tc>, window_params = [{transform_indices = @transform_0, window_bounds = array<i64: 128, 128>}, {pipeline_mode = #tpu.pipeline_mode<synchronous>, transform_indices = @transform_1, window_bounds = array<i64: 1, 128>}, {pipeline_mode = #tpu.pipeline_mode<synchronous>, transform_indices = @transform_2, window_bounds = array<i64: 1, 128>}, {transform_indices = @transform_3, window_bounds = array<i64: 128, 128>}]} {
    %c0 = arith.constant 0 : index
    %c0_0 = arith.constant 0 : index
    %0 = vector.load %arg1[%c0, %c0_0] : memref<128x128xbf16, #tpu.memory_space<vmem>>, vector<128x128xbf16>
    %1 = arith.extf %0 : vector<128x128xbf16> to vector<128x128xf32>
    %c0_1 = arith.constant 0 : index
    %c0_2 = arith.constant 0 : index
    %2 = vector.load %arg2[%c0_1, %c0_2] : memref<1x128xf32, #tpu.memory_space<vmem>>, vector<1x128xf32>
    %3 = vector.broadcast %2 : vector<1x128xf32> to vector<128x128xf32>
    %4 = arith.mulf %1, %3 : vector<128x128xf32>
    %c0_3 = arith.constant 0 : index
    %c0_4 = arith.constant 0 : index
    %5 = vector.load %arg3[%c0_3, %c0_4] : memref<1x128xf32, #tpu.memory_space<vmem>>, vector<1x128xf32>
    %6 = vector.broadcast %5 : vector<1x128xf32> to vector<128x128xf32>
    %7 = arith.addf %4, %6 : vector<128x128xf32>
    %cst = arith.constant 0.000000e+00 : f32
    %8 = vector.broadcast %cst : f32 to vector<128x128xf32>
    %9 = arith.maximumf %7, %8 : vector<128x128xf32>
    %10 = arith.truncf %9 : vector<128x128xf32> to vector<128x128xbf16>
    %c0_5 = arith.constant 0 : index
    %c0_6 = arith.constant 0 : index
    %11 = vector.load %arg4[%c0_5, %c0_6] : memref<128x128xbf16, #tpu.memory_space<vmem>>, vector<128x128xbf16>
    tpu.vector_store %arg4[%c0_5, %c0_6], %10 {strides = array<i32>} : memref<128x128xbf16, #tpu.memory_space<vmem>>, vector<128x128xbf16>,
    return
  }
  func.func @transform_0(%arg0: i32) -> (i32, i32) {
    %c0_i32 = arith.constant 0 : i32
    %c0_i32_0 = arith.constant 0 : i32
    return %arg0, %c0_i32 : i32, i32
  }
  func.func @transform_1(%arg0: i32) -> (i32, i32) {
    %c0_i32 = arith.constant 0 : i32
    %c0_i32_0 = arith.constant 0 : i32
    %c0_i32_1 = arith.constant 0 : i32
    return %c0_i32, %c0_i32_0 : i32, i32
  }
  func.func @transform_2(%arg0: i32) -> (i32, i32) {
    %c0_i32 = arith.constant 0 : i32
    %c0_i32_0 = arith.constant 0 : i32
    %c0_i32_1 = arith.constant 0 : i32
    return %c0_i32, %c0_i32_0 : i32, i32
  }
  func.func @transform_3(%arg0: i32) -> (i32, i32) {
    %c0_i32 = arith.constant 0 : i32
    %c0_i32_0 = arith.constant 0 : i32
    return %arg0, %c0_i32 : i32, i32
  }
}

module attributes {stable_mosaic.version = 11 : i64} {
  func.func @_pair_matmul_stats_kernel(%arg0: i32, %arg1: i32, %arg2: memref<128x128xbf16, #tpu.memory_space<vmem>>, %arg3: memref<128x128xbf16, #tpu.memory_space<vmem>>, %arg4: memref<128x128xbf16, #tpu.memory_space<vmem>>, %arg5: memref<128x128xbf16, #tpu.memory_space<vmem>>, %arg6: memref<128x128xbf16, #tpu.memory_space<vmem>>, %arg7: memref<128x128xbf16, #tpu.memory_space<vmem>>, %arg8: memref<8x128xf32, #tpu.memory_space<vmem>>, %arg9: memref<8x128xf32, #tpu.memory_space<vmem>>, %arg10: memref<8x128xf32, #tpu.memory_space<vmem>>, %arg11: memref<8x128xf32, #tpu.memory_space<vmem>>) attributes {dimension_semantics = [#tpu.dimension_semantics<parallel>, #tpu.dimension_semantics<arbitrary>], iteration_bounds = array<i64: 1, 1>, scalar_prefetch = 0 : i64, scratch_operands = 0 : i64, tpu.core_type = #tpu.core_type<tc>, window_params = [{transform_indices = @transform_0, window_bounds = array<i64: 128, 128>}, {pipeline_mode = #tpu.pipeline_mode<synchronous>, transform_indices = @transform_1, window_bounds = array<i64: 128, 128>}, {transform_indices = @transform_2, window_bounds = array<i64: 128, 128>}, {pipeline_mode = #tpu.pipeline_mode<synchronous>, transform_indices = @transform_3, window_bounds = array<i64: 128, 128>}, {transform_indices = @transform_4, window_bounds = array<i64: 128, 128>}, {transform_indices = @transform_5, window_bounds = array<i64: 128, 128>}, {transform_indices = @transform_6, window_bounds = array<i64: 8, 128>}, {transform_indices = @transform_7, window_bounds = array<i64: 8, 128>}, {transform_indices = @transform_8, window_bounds = array<i64: 8, 128>}, {transform_indices = @transform_9, window_bounds = array<i64: 8, 128>}]} {
    %c0_i32 = arith.constant 0 : i32
    %0 = arith.cmpi eq, %arg1, %c0_i32 : i32
    %1 = arith.extui %0 : i1 to i32
    %c0_i32_0 = arith.constant 0 : i32
    %2 = arith.cmpi ne, %1, %c0_i32_0 : i32
    scf.if %2 {
      %cst_33 = arith.constant 0.000000e+00 : f32
      %33 = vector.broadcast %cst_33 : f32 to vector<8x128xf32>
      %c0_34 = arith.constant 0 : index
      %c0_35 = arith.constant 0 : index
      %34 = vector.load %arg8[%c0_34, %c0_35] : memref<8x128xf32, #tpu.memory_space<vmem>>, vector<8x128xf32>
      tpu.vector_store %arg8[%c0_34, %c0_35], %33 {strides = array<i32>} : memref<8x128xf32, #tpu.memory_space<vmem>>, vector<8x128xf32>,
      %cst_36 = arith.constant 0.000000e+00 : f32
      %35 = vector.broadcast %cst_36 : f32 to vector<8x128xf32>
      %c0_37 = arith.constant 0 : index
      %c0_38 = arith.constant 0 : index
      %36 = vector.load %arg9[%c0_37, %c0_38] : memref<8x128xf32, #tpu.memory_space<vmem>>, vector<8x128xf32>
      tpu.vector_store %arg9[%c0_37, %c0_38], %35 {strides = array<i32>} : memref<8x128xf32, #tpu.memory_space<vmem>>, vector<8x128xf32>,
      %cst_39 = arith.constant 0.000000e+00 : f32
      %37 = vector.broadcast %cst_39 : f32 to vector<8x128xf32>
      %c0_40 = arith.constant 0 : index
      %c0_41 = arith.constant 0 : index
      %38 = vector.load %arg10[%c0_40, %c0_41] : memref<8x128xf32, #tpu.memory_space<vmem>>, vector<8x128xf32>
      tpu.vector_store %arg10[%c0_40, %c0_41], %37 {strides = array<i32>} : memref<8x128xf32, #tpu.memory_space<vmem>>, vector<8x128xf32>,
      %cst_42 = arith.constant 0.000000e+00 : f32
      %39 = vector.broadcast %cst_42 : f32 to vector<8x128xf32>
      %c0_43 = arith.constant 0 : index
      %c0_44 = arith.constant 0 : index
      %40 = vector.load %arg11[%c0_43, %c0_44] : memref<8x128xf32, #tpu.memory_space<vmem>>, vector<8x128xf32>
      tpu.vector_store %arg11[%c0_43, %c0_44], %39 {strides = array<i32>} : memref<8x128xf32, #tpu.memory_space<vmem>>, vector<8x128xf32>,
    } else {
    }
    %c0 = arith.constant 0 : index
    %c0_1 = arith.constant 0 : index
    %3 = vector.load %arg2[%c0, %c0_1] : memref<128x128xbf16, #tpu.memory_space<vmem>>, vector<128x128xbf16>
    %c0_2 = arith.constant 0 : index
    %c0_3 = arith.constant 0 : index
    %4 = vector.load %arg3[%c0_2, %c0_3] : memref<128x128xbf16, #tpu.memory_space<vmem>>, vector<128x128xbf16>
    %cst = arith.constant dense<0.000000e+00> : vector<128x128xf32>
    %5 = tpu.matmul %3, %4, %cst {dimension_numbers = #tpu.dot_dimension_numbers<[1], [0], [0], [1], [0, 0, 1, 1], [], []>} : vector<128x128xbf16>, vector<128x128xbf16>, vector<128x128xf32> -> vector<128x128xf32>
    %c0_4 = arith.constant 0 : index
    %c0_5 = arith.constant 0 : index
    %6 = vector.load %arg4[%c0_4, %c0_5] : memref<128x128xbf16, #tpu.memory_space<vmem>>, vector<128x128xbf16>
    %c0_6 = arith.constant 0 : index
    %c0_7 = arith.constant 0 : index
    %7 = vector.load %arg5[%c0_6, %c0_7] : memref<128x128xbf16, #tpu.memory_space<vmem>>, vector<128x128xbf16>
    %cst_8 = arith.constant dense<0.000000e+00> : vector<128x128xf32>
    %8 = tpu.matmul %6, %7, %cst_8 {dimension_numbers = #tpu.dot_dimension_numbers<[1], [0], [0], [1], [0, 0, 1, 1], [], []>} : vector<128x128xbf16>, vector<128x128xbf16>, vector<128x128xf32> -> vector<128x128xf32>
    %9 = arith.truncf %5 : vector<128x128xf32> to vector<128x128xbf16>
    %c0_9 = arith.constant 0 : index
    %c0_10 = arith.constant 0 : index
    %10 = vector.load %arg6[%c0_9, %c0_10] : memref<128x128xbf16, #tpu.memory_space<vmem>>, vector<128x128xbf16>
    tpu.vector_store %arg6[%c0_9, %c0_10], %9 {strides = array<i32>} : memref<128x128xbf16, #tpu.memory_space<vmem>>, vector<128x128xbf16>,
    %11 = arith.truncf %8 : vector<128x128xf32> to vector<128x128xbf16>
    %c0_11 = arith.constant 0 : index
    %c0_12 = arith.constant 0 : index
    %12 = vector.load %arg7[%c0_11, %c0_12] : memref<128x128xbf16, #tpu.memory_space<vmem>>, vector<128x128xbf16>
    tpu.vector_store %arg7[%c0_11, %c0_12], %11 {strides = array<i32>} : memref<128x128xbf16, #tpu.memory_space<vmem>>, vector<128x128xbf16>,
    %13 = vector.shape_cast %5 : vector<128x128xf32> to vector<16x8x128xf32>
    %14 = vector.shape_cast %8 : vector<128x128xf32> to vector<16x8x128xf32>
    %c0_13 = arith.constant 0 : index
    %c0_14 = arith.constant 0 : index
    %15 = vector.load %arg8[%c0_13, %c0_14] : memref<8x128xf32, #tpu.memory_space<vmem>>, vector<8x128xf32>
    %cst_15 = arith.constant dense<0.000000e+00> : vector<8x128xf32>
    %16 = vector.multi_reduction <add>, %13, %cst_15 [0] : vector<16x8x128xf32> to vector<8x128xf32>
    %17 = arith.addf %15, %16 : vector<8x128xf32>
    %c0_16 = arith.constant 0 : index
    %c0_17 = arith.constant 0 : index
    %18 = vector.load %arg8[%c0_16, %c0_17] : memref<8x128xf32, #tpu.memory_space<vmem>>, vector<8x128xf32>
    tpu.vector_store %arg8[%c0_16, %c0_17], %17 {strides = array<i32>} : memref<8x128xf32, #tpu.memory_space<vmem>>, vector<8x128xf32>,
    %c0_18 = arith.constant 0 : index
    %c0_19 = arith.constant 0 : index
    %19 = vector.load %arg9[%c0_18, %c0_19] : memref<8x128xf32, #tpu.memory_space<vmem>>, vector<8x128xf32>
    %20 = arith.mulf %13, %13 : vector<16x8x128xf32>
    %cst_20 = arith.constant dense<0.000000e+00> : vector<8x128xf32>
    %21 = vector.multi_reduction <add>, %20, %cst_20 [0] : vector<16x8x128xf32> to vector<8x128xf32>
    %22 = arith.addf %19, %21 : vector<8x128xf32>
    %c0_21 = arith.constant 0 : index
    %c0_22 = arith.constant 0 : index
    %23 = vector.load %arg9[%c0_21, %c0_22] : memref<8x128xf32, #tpu.memory_space<vmem>>, vector<8x128xf32>
    tpu.vector_store %arg9[%c0_21, %c0_22], %22 {strides = array<i32>} : memref<8x128xf32, #tpu.memory_space<vmem>>, vector<8x128xf32>,
    %c0_23 = arith.constant 0 : index
    %c0_24 = arith.constant 0 : index
    %24 = vector.load %arg10[%c0_23, %c0_24] : memref<8x128xf32, #tpu.memory_space<vmem>>, vector<8x128xf32>
    %cst_25 = arith.constant dense<0.000000e+00> : vector<8x128xf32>
    %25 = vector.multi_reduction <add>, %14, %cst_25 [0] : vector<16x8x128xf32> to vector<8x128xf32>
    %26 = arith.addf %24, %25 : vector<8x128xf32>
    %c0_26 = arith.constant 0 : index
    %c0_27 = arith.constant 0 : index
    %27 = vector.load %arg10[%c0_26, %c0_27] : memref<8x128xf32, #tpu.memory_space<vmem>>, vector<8x128xf32>
    tpu.vector_store %arg10[%c0_26, %c0_27], %26 {strides = array<i32>} : memref<8x128xf32, #tpu.memory_space<vmem>>, vector<8x128xf32>,
    %c0_28 = arith.constant 0 : index
    %c0_29 = arith.constant 0 : index
    %28 = vector.load %arg11[%c0_28, %c0_29] : memref<8x128xf32, #tpu.memory_space<vmem>>, vector<8x128xf32>
    %29 = arith.mulf %14, %14 : vector<16x8x128xf32>
    %cst_30 = arith.constant dense<0.000000e+00> : vector<8x128xf32>
    %30 = vector.multi_reduction <add>, %29, %cst_30 [0] : vector<16x8x128xf32> to vector<8x128xf32>
    %31 = arith.addf %28, %30 : vector<8x128xf32>
    %c0_31 = arith.constant 0 : index
    %c0_32 = arith.constant 0 : index
    %32 = vector.load %arg11[%c0_31, %c0_32] : memref<8x128xf32, #tpu.memory_space<vmem>>, vector<8x128xf32>
    tpu.vector_store %arg11[%c0_31, %c0_32], %31 {strides = array<i32>} : memref<8x128xf32, #tpu.memory_space<vmem>>, vector<8x128xf32>,
    return
  }
  func.func @transform_0(%arg0: i32, %arg1: i32) -> (i32, i32) {
    %c1_i32 = arith.constant 1 : i32
    %0 = arith.muli %arg0, %c1_i32 : i32
    %1 = arith.addi %0, %arg1 : i32
    %c0_i32 = arith.constant 0 : i32
    %c0_i32_0 = arith.constant 0 : i32
    return %1, %c0_i32 : i32, i32
  }
  func.func @transform_1(%arg0: i32, %arg1: i32) -> (i32, i32) {
    %c0_i32 = arith.constant 0 : i32
    %c0_i32_0 = arith.constant 0 : i32
    %c0_i32_1 = arith.constant 0 : i32
    return %c0_i32, %c0_i32_0 : i32, i32
  }
  func.func @transform_2(%arg0: i32, %arg1: i32) -> (i32, i32) {
    %c1_i32 = arith.constant 1 : i32
    %0 = arith.muli %arg0, %c1_i32 : i32
    %1 = arith.addi %0, %arg1 : i32
    %c0_i32 = arith.constant 0 : i32
    %c0_i32_0 = arith.constant 0 : i32
    return %1, %c0_i32 : i32, i32
  }
  func.func @transform_3(%arg0: i32, %arg1: i32) -> (i32, i32) {
    %c0_i32 = arith.constant 0 : i32
    %c0_i32_0 = arith.constant 0 : i32
    %c0_i32_1 = arith.constant 0 : i32
    return %c0_i32, %c0_i32_0 : i32, i32
  }
  func.func @transform_4(%arg0: i32, %arg1: i32) -> (i32, i32) {
    %c1_i32 = arith.constant 1 : i32
    %0 = arith.muli %arg0, %c1_i32 : i32
    %1 = arith.addi %0, %arg1 : i32
    %c0_i32 = arith.constant 0 : i32
    %c0_i32_0 = arith.constant 0 : i32
    return %1, %c0_i32 : i32, i32
  }
  func.func @transform_5(%arg0: i32, %arg1: i32) -> (i32, i32) {
    %c1_i32 = arith.constant 1 : i32
    %0 = arith.muli %arg0, %c1_i32 : i32
    %1 = arith.addi %0, %arg1 : i32
    %c0_i32 = arith.constant 0 : i32
    %c0_i32_0 = arith.constant 0 : i32
    return %1, %c0_i32 : i32, i32
  }
  func.func @transform_6(%arg0: i32, %arg1: i32) -> (i32, i32) {
    %c0_i32 = arith.constant 0 : i32
    %c0_i32_0 = arith.constant 0 : i32
    return %arg0, %c0_i32 : i32, i32
  }
  func.func @transform_7(%arg0: i32, %arg1: i32) -> (i32, i32) {
    %c0_i32 = arith.constant 0 : i32
    %c0_i32_0 = arith.constant 0 : i32
    return %arg0, %c0_i32 : i32, i32
  }
  func.func @transform_8(%arg0: i32, %arg1: i32) -> (i32, i32) {
    %c0_i32 = arith.constant 0 : i32
    %c0_i32_0 = arith.constant 0 : i32
    return %arg0, %c0_i32 : i32, i32
  }
  func.func @transform_9(%arg0: i32, %arg1: i32) -> (i32, i32) {
    %c0_i32 = arith.constant 0 : i32
    %c0_i32_0 = arith.constant 0 : i32
    return %arg0, %c0_i32 : i32, i32
  }
}

module attributes {stable_mosaic.version = 11 : i64} {
  func.func @_bn_pair_add_relu_kernel(%arg0: i32, %arg1: memref<128x128xbf16, #tpu.memory_space<vmem>>, %arg2: memref<1x128xf32, #tpu.memory_space<vmem>>, %arg3: memref<1x128xf32, #tpu.memory_space<vmem>>, %arg4: memref<128x128xbf16, #tpu.memory_space<vmem>>, %arg5: memref<1x128xf32, #tpu.memory_space<vmem>>, %arg6: memref<1x128xf32, #tpu.memory_space<vmem>>, %arg7: memref<128x128xf32, #tpu.memory_space<vmem>>) attributes {dimension_semantics = [#tpu.dimension_semantics<parallel>], iteration_bounds = array<i64: 1>, scalar_prefetch = 0 : i64, scratch_operands = 0 : i64, tpu.core_type = #tpu.core_type<tc>, window_params = [{transform_indices = @transform_0, window_bounds = array<i64: 128, 128>}, {pipeline_mode = #tpu.pipeline_mode<synchronous>, transform_indices = @transform_1, window_bounds = array<i64: 1, 128>}, {pipeline_mode = #tpu.pipeline_mode<synchronous>, transform_indices = @transform_2, window_bounds = array<i64: 1, 128>}, {transform_indices = @transform_3, window_bounds = array<i64: 128, 128>}, {pipeline_mode = #tpu.pipeline_mode<synchronous>, transform_indices = @transform_4, window_bounds = array<i64: 1, 128>}, {pipeline_mode = #tpu.pipeline_mode<synchronous>, transform_indices = @transform_5, window_bounds = array<i64: 1, 128>}, {transform_indices = @transform_6, window_bounds = array<i64: 128, 128>}]} {
    %c0 = arith.constant 0 : index
    %c0_0 = arith.constant 0 : index
    %0 = vector.load %arg1[%c0, %c0_0] : memref<128x128xbf16, #tpu.memory_space<vmem>>, vector<128x128xbf16>
    %1 = arith.extf %0 : vector<128x128xbf16> to vector<128x128xf32>
    %c0_1 = arith.constant 0 : index
    %c0_2 = arith.constant 0 : index
    %2 = vector.load %arg4[%c0_1, %c0_2] : memref<128x128xbf16, #tpu.memory_space<vmem>>, vector<128x128xbf16>
    %3 = arith.extf %2 : vector<128x128xbf16> to vector<128x128xf32>
    %c0_3 = arith.constant 0 : index
    %c0_4 = arith.constant 0 : index
    %4 = vector.load %arg2[%c0_3, %c0_4] : memref<1x128xf32, #tpu.memory_space<vmem>>, vector<1x128xf32>
    %5 = vector.broadcast %4 : vector<1x128xf32> to vector<128x128xf32>
    %6 = arith.mulf %1, %5 : vector<128x128xf32>
    %c0_5 = arith.constant 0 : index
    %c0_6 = arith.constant 0 : index
    %7 = vector.load %arg3[%c0_5, %c0_6] : memref<1x128xf32, #tpu.memory_space<vmem>>, vector<1x128xf32>
    %8 = vector.broadcast %7 : vector<1x128xf32> to vector<128x128xf32>
    %9 = arith.addf %6, %8 : vector<128x128xf32>
    %c0_7 = arith.constant 0 : index
    %c0_8 = arith.constant 0 : index
    %10 = vector.load %arg5[%c0_7, %c0_8] : memref<1x128xf32, #tpu.memory_space<vmem>>, vector<1x128xf32>
    %11 = vector.broadcast %10 : vector<1x128xf32> to vector<128x128xf32>
    %12 = arith.mulf %3, %11 : vector<128x128xf32>
    %c0_9 = arith.constant 0 : index
    %c0_10 = arith.constant 0 : index
    %13 = vector.load %arg6[%c0_9, %c0_10] : memref<1x128xf32, #tpu.memory_space<vmem>>, vector<1x128xf32>
    %14 = vector.broadcast %13 : vector<1x128xf32> to vector<128x128xf32>
    %15 = arith.addf %12, %14 : vector<128x128xf32>
    %16 = arith.addf %9, %15 : vector<128x128xf32>
    %cst = arith.constant 0.000000e+00 : f32
    %17 = vector.broadcast %cst : f32 to vector<128x128xf32>
    %18 = arith.maximumf %16, %17 : vector<128x128xf32>
    %c0_11 = arith.constant 0 : index
    %c0_12 = arith.constant 0 : index
    %19 = vector.load %arg7[%c0_11, %c0_12] : memref<128x128xf32, #tpu.memory_space<vmem>>, vector<128x128xf32>
    tpu.vector_store %arg7[%c0_11, %c0_12], %18 {strides = array<i32>} : memref<128x128xf32, #tpu.memory_space<vmem>>, vector<128x128xf32>,
    return
  }
  func.func @transform_0(%arg0: i32) -> (i32, i32) {
    %c0_i32 = arith.constant 0 : i32
    %c0_i32_0 = arith.constant 0 : i32
    return %arg0, %c0_i32 : i32, i32
  }
  func.func @transform_1(%arg0: i32) -> (i32, i32) {
    %c0_i32 = arith.constant 0 : i32
    %c0_i32_0 = arith.constant 0 : i32
    %c0_i32_1 = arith.constant 0 : i32
    return %c0_i32, %c0_i32_0 : i32, i32
  }
  func.func @transform_2(%arg0: i32) -> (i32, i32) {
    %c0_i32 = arith.constant 0 : i32
    %c0_i32_0 = arith.constant 0 : i32
    %c0_i32_1 = arith.constant 0 : i32
    return %c0_i32, %c0_i32_0 : i32, i32
  }
  func.func @transform_3(%arg0: i32) -> (i32, i32) {
    %c0_i32 = arith.constant 0 : i32
    %c0_i32_0 = arith.constant 0 : i32
    return %arg0, %c0_i32 : i32, i32
  }
  func.func @transform_4(%arg0: i32) -> (i32, i32) {
    %c0_i32 = arith.constant 0 : i32
    %c0_i32_0 = arith.constant 0 : i32
    %c0_i32_1 = arith.constant 0 : i32
    return %c0_i32, %c0_i32_0 : i32, i32
  }
  func.func @transform_5(%arg0: i32) -> (i32, i32) {
    %c0_i32 = arith.constant 0 : i32
    %c0_i32_0 = arith.constant 0 : i32
    %c0_i32_1 = arith.constant 0 : i32
    return %c0_i32, %c0_i32_0 : i32, i32
  }
  func.func @transform_6(%arg0: i32) -> (i32, i32) {
    %c0_i32 = arith.constant 0 : i32
    %c0_i32_0 = arith.constant 0 : i32
    return %arg0, %c0_i32 : i32, i32
  }
}

</mosaic_0001>

<llo_original>
// kernel: basic_block_forward.5
$region0: #{basic_block_forward.5}
  #allocation0 [shape = 'u32[]', space=smem, size = 0x4, offset = 0x4, fixed_abs, tag = 'smem constant byte address 0x4 - core index']
  #allocation1 [shape = 'u32[144,128]{1,0:T(1,128)}', space=vmem, size = 0x12000, scoped, tag = 'internal scratch']
  %s0 = inlined_call_operand.vmem [shape: bf16[128,128], index: 0, kind: input, shape index: {}]
  %s1 = inlined_call_operand.vmem [shape: f32[1,128], index: 1, kind: input, shape index: {}]
  %s2 = inlined_call_operand.vmem [shape: f32[1,128], index: 2, kind: input, shape index: {}]
  %s3 = inlined_call_operand.vmem [shape: bf16[128,128], index: 3, kind: output, shape index: {}]
  %s4 = sld [smem:[#allocation0]]
  $region22: #{basic_block_forward.5} parent=0
    _
  %s6 = ssub.s32 1, %s4
  %s7 = scalar_select 0, %s6, %s4
  // Predicated region
  $region2: #{basic_block_forward.5} parent=0 // pred_check
    _
  $region3: #{basic_block_forward.5} parent=0 // pred_check_branch
    %9 = sbr.rel (0) target = $region5
  $region4: #{basic_block_forward.5} parent=0 // pred_region
    _
  $region5: #{basic_block_forward.5} parent=0 // pred_fallthru
    _
  // Predicated region
  $region6: #{basic_block_forward.5} parent=0 // pred_check
    _
  $region7: #{basic_block_forward.5} parent=0 // pred_check_branch
    %11 = sbr.rel (0) target = $region9
  $region8: #{basic_block_forward.5} parent=0 // pred_region
    _
  $region9: #{basic_block_forward.5} parent=0 // pred_fallthru
    _
  // Predicated region
  $region10: #{basic_block_forward.5} parent=0 // pred_check
    _
  $region11: #{basic_block_forward.5} parent=0 // pred_check_branch
    %13 = sbr.rel (0) target = $region13
  $region12: #{basic_block_forward.5} parent=0 // pred_region
    _
  $region13: #{basic_block_forward.5} parent=0 // pred_fallthru
    _
  %v14 = vld [vmem:[%s0] sm:$0xf]
  %v15 = vld [vmem:[%s0 + $0x4] sm:$0xf]
  %v16 = vld [vmem:[%s0 + $0x8] sm:$0xf]
  %v17 = vld [vmem:[%s0 + $0xc] sm:$0xf]
  %v18 = vld [vmem:[%s0 + $0x10] sm:$0xf]
  %v19 = vld [vmem:[%s0 + $0x14] sm:$0xf]
  %v20 = vld [vmem:[%s0 + $0x18] sm:$0xf]
  %v21 = vld [vmem:[%s0 + $0x1c] sm:$0xf]
  %v22 = vld [vmem:[%s0 + $0x20] sm:$0xf]
  %v23 = vld [vmem:[%s0 + $0x24] sm:$0xf]
  %v24 = vld [vmem:[%s0 + $0x28] sm:$0xf]
  %v25 = vld [vmem:[%s0 + $0x2c] sm:$0xf]
  %v26 = vld [vmem:[%s0 + $0x30] sm:$0xf]
  %v27 = vld [vmem:[%s0 + $0x34] sm:$0xf]
  %v28 = vld [vmem:[%s0 + $0x38] sm:$0xf]
  %v29 = vld [vmem:[%s0 + $0x3c] sm:$0xf]
  %v30 = vunpack.c.l.bf16 %v14
  %v31 = vunpack.c.l.bf16 %v15
  %v32 = vunpack.c.l.bf16 %v16
  %v33 = vunpack.c.l.bf16 %v17
  %v34 = vunpack.c.l.bf16 %v18
  %v35 = vunpack.c.l.bf16 %v19
  %v36 = vunpack.c.l.bf16 %v20
  %v37 = vunpack.c.l.bf16 %v21
  %v38 = vunpack.c.l.bf16 %v22
  %v39 = vunpack.c.l.bf16 %v23
  %v40 = vunpack.c.l.bf16 %v24
  %v41 = vunpack.c.l.bf16 %v25
  %v42 = vunpack.c.l.bf16 %v26
  %v43 = vunpack.c.l.bf16 %v27
  %v44 = vunpack.c.l.bf16 %v28
  %v45 = vunpack.c.l.bf16 %v29
  %v46 = vld [vmem:[%s1] sm:$0x1]
  %v48 = vlaneseq
  %v49 = vshrl.u32 %v48, 7
  %v50 = vsub.s32 0, %v49
  %v51 = vrot.slane %v46, %v50
  %v53 = vmul.f32 %v30, %v51
  %v54 = vmul.f32 %v31, %v51
  %v55 = vmul.f32 %v32, %v51
  %v56 = vmul.f32 %v33, %v51
  %v57 = vmul.f32 %v34, %v51
  %v58 = vmul.f32 %v35, %v51
  %v59 = vmul.f32 %v36, %v51
  %v60 = vmul.f32 %v37, %v51
  %v61 = vmul.f32 %v38, %v51
  %v62 = vmul.f32 %v39, %v51
  %v63 = vmul.f32 %v40, %v51
  %v64 = vmul.f32 %v41, %v51
  %v65 = vmul.f32 %v42, %v51
  %v66 = vmul.f32 %v43, %v51
  %v67 = vmul.f32 %v44, %v51
  %v68 = vmul.f32 %v45, %v51
  %v69 = vld [vmem:[%s2] sm:$0x1]
  %v71 = vlaneseq
  %v72 = vshrl.u32 %v71, 7
  %v73 = vsub.s32 0, %v72
  %v74 = vrot.slane %v69, %v73
  %v76 = vadd.f32 %v53, %v74
  %v77 = vadd.f32 %v54, %v74
  %v78 = vadd.f32 %v55, %v74
  %v79 = vadd.f32 %v56, %v74
  %v80 = vadd.f32 %v57, %v74
  %v81 = vadd.f32 %v58, %v74
  %v82 = vadd.f32 %v59, %v74
  %v83 = vadd.f32 %v60, %v74
  %v84 = vadd.f32 %v61, %v74
  %v85 = vadd.f32 %v62, %v74
  %v86 = vadd.f32 %v63, %v74
  %v87 = vadd.f32 %v64, %v74
  %v88 = vadd.f32 %v65, %v74
  %v89 = vadd.f32 %v66, %v74
  %v90 = vadd.f32 %v67, %v74
  %v91 = vadd.f32 %v68, %v74
  %v92 = vmax.f32 %v76, 0.0
  %v93 = vmax.f32 %v77, 0.0
  %v94 = vmax.f32 %v78, 0.0
  %v95 = vmax.f32 %v79, 0.0
  %v96 = vmax.f32 %v80, 0.0
  %v97 = vmax.f32 %v81, 0.0
  %v98 = vmax.f32 %v82, 0.0
  %v99 = vmax.f32 %v83, 0.0
  %v100 = vmax.f32 %v84, 0.0
  %v101 = vmax.f32 %v85, 0.0
  %v102 = vmax.f32 %v86, 0.0
  %v103 = vmax.f32 %v87, 0.0
  %v104 = vmax.f32 %v88, 0.0
  %v105 = vmax.f32 %v89, 0.0
  %v106 = vmax.f32 %v90, 0.0
  %v107 = vmax.f32 %v91, 0.0
  %v108 = vpack.c.bf16 %v93, %v92
  %v109 = vpack.c.bf16 %v95, %v94
  %v110 = vpack.c.bf16 %v97, %v96
  %v111 = vpack.c.bf16 %v99, %v98
  %v112 = vpack.c.bf16 %v101, %v100
  %v113 = vpack.c.bf16 %v103, %v102
  %v114 = vpack.c.bf16 %v105, %v104
  %v115 = vpack.c.bf16 %v107, %v106
  %v124 = vunpack.c.l.b16 %v108
  %v125 = vunpack.c.h.b16 %v108
  %v126 = vunpack.c.l.b16 %v109
  %v127 = vunpack.c.h.b16 %v109
  %v128 = vunpack.c.l.b16 %v110
  %v129 = vunpack.c.h.b16 %v110
  %v130 = vunpack.c.l.b16 %v111
  %v131 = vunpack.c.h.b16 %v111
  %v132 = vunpack.c.l.b16 %v112
  %v133 = vunpack.c.h.b16 %v112
  %v134 = vunpack.c.l.b16 %v113
  %v135 = vunpack.c.h.b16 %v113
  %v136 = vunpack.c.l.b16 %v114
  %v137 = vunpack.c.h.b16 %v114
  %v138 = vunpack.c.l.b16 %v115
  %v139 = vunpack.c.h.b16 %v115
  %v140 = vpack.c.b16 %v124, %v124
  %v141 = vpack.c.b16 %v125, %v125
  %v142 = vpack.c.b16 %v126, %v126
  %v143 = vpack.c.b16 %v127, %v127
  %v144 = vpack.c.b16 %v128, %v128
  %v145 = vpack.c.b16 %v129, %v129
  %v146 = vpack.c.b16 %v130, %v130
  %v147 = vpack.c.b16 %v131, %v131
  %v148 = vpack.c.b16 %v132, %v132
  %v149 = vpack.c.b16 %v133, %v133
  %v150 = vpack.c.b16 %v134, %v134
  %v151 = vpack.c.b16 %v135, %v135
  %v152 = vpack.c.b16 %v136, %v136
  %v153 = vpack.c.b16 %v137, %v137
  %v154 = vpack.c.b16 %v138, %v138
  %v155 = vpack.c.b16 %v139, %v139
  %172 = vst [vmem:[%s3] sm:$0xf] %v140
  %173 = vst [vmem:[%s3 + $0x4] sm:$0xf] %v141
  %174 = vst [vmem:[%s3 + $0x8] sm:$0xf] %v142
  %175 = vst [vmem:[%s3 + $0xc] sm:$0xf] %v143
  %176 = vst [vmem:[%s3 + $0x10] sm:$0xf] %v144
  %177 = vst [vmem:[%s3 + $0x14] sm:$0xf] %v145
  %178 = vst [vmem:[%s3 + $0x18] sm:$0xf] %v146
  %179 = vst [vmem:[%s3 + $0x1c] sm:$0xf] %v147
  %180 = vst [vmem:[%s3 + $0x20] sm:$0xf] %v148
  %181 = vst [vmem:[%s3 + $0x24] sm:$0xf] %v149
  %182 = vst [vmem:[%s3 + $0x28] sm:$0xf] %v150
  %183 = vst [vmem:[%s3 + $0x2c] sm:$0xf] %v151
  %184 = vst [vmem:[%s3 + $0x30] sm:$0xf] %v152
  %185 = vst [vmem:[%s3 + $0x34] sm:$0xf] %v153
  %186 = vst [vmem:[%s3 + $0x38] sm:$0xf] %v154
  %187 = vst [vmem:[%s3 + $0x3c] sm:$0xf] %v155
  // Predicated region
  $region14: #{basic_block_forward.5} parent=0 // pred_check
    _
  $region15: #{basic_block_forward.5} parent=0 // pred_check_branch
    %189 = sbr.rel (0) target = $region17
  $region16: #{basic_block_forward.5} parent=0 // pred_region
    _
  $region17: #{basic_block_forward.5} parent=0 // pred_fallthru
    _
  // Predicated region
  $region18: #{basic_block_forward.5} parent=0 // pred_check
    _
  $region19: #{basic_block_forward.5} parent=0 // pred_check_branch
    %191 = sbr.rel (0) target = $region21
  $region20: #{basic_block_forward.5} parent=0 // pred_region
    _
  $region21: #{basic_block_forward.5} parent=0 // pred_fallthru
    _

// kernel: basic_block_forward.4
$region0: #{basic_block_forward.4}
  #allocation0 [shape = 'u32[]', space=smem, size = 0x4, offset = 0x4, fixed_abs, tag = 'smem constant byte address 0x4 - core index']
  #allocation1 [shape = 'u32[144,128]{1,0:T(1,128)}', space=vmem, size = 0x12000, scoped, tag = 'internal scratch']
  %s0 = inlined_call_operand.vmem [shape: bf16[128,128], index: 0, kind: input, shape index: {}]
  %s1 = inlined_call_operand.vmem [shape: bf16[128,128], index: 1, kind: input, shape index: {}]
  %s2 = inlined_call_operand.vmem [shape: bf16[128,128], index: 2, kind: output, shape index: {0}]
  %s3 = inlined_call_operand.vmem [shape: f32[8,128], index: 3, kind: output, shape index: {1}]
  %s4 = inlined_call_operand.vmem [shape: f32[8,128], index: 4, kind: output, shape index: {2}]
  %5 = xla_tuple %s2, %s3, %s4
  %s6 = sld [smem:[#allocation0]]
  $region38: #{basic_block_forward.4} parent=0
    _
  %s8 = ssub.s32 1, %s6
  %s9 = scalar_select 0, %s8, %s6
  // Predicated region
  $region2: #{basic_block_forward.4} parent=0 // pred_check
    _
  $region3: #{basic_block_forward.4} parent=0 // pred_check_branch
    %11 = sbr.rel (0) target = $region5
  $region4: #{basic_block_forward.4} parent=0 // pred_region
    %s12 = sadd.s32 0, 0
    %s13 = smul.u32 16, %s12
    %p14 = scmp.lt.s32.totalorder %s13, 15
    %s15 = scalar_select %p14, %s13, 15
    %s16 = smul.addr %s15, 4
    %s17 = scalar_lea.vmem %s0, %s16
    %s18 = sadd.s32 0, 0
    %s19 = smul.u32 16, %s18
  $region5: #{basic_block_forward.4} parent=0 // pred_fallthru
    _
  // Predicated region
  $region6: #{basic_block_forward.4} parent=0 // pred_check
    _
  $region7: #{basic_block_forward.4} parent=0 // pred_check_branch
    %21 = sbr.rel (0) target = $region9
  $region8: #{basic_block_forward.4} parent=0 // pred_region
    _
  $region9: #{basic_block_forward.4} parent=0 // pred_fallthru
    _
  %s22 = sadd.s32 0, 0
  %s23 = smul.u32 16, %s22
  %p24 = scmp.lt.s32.totalorder %s23, 15
  %s25 = scalar_select %p24, %s23, 15
  %s26 = smul.addr %s25, 4
  %s27 = scalar_lea.vmem %s0, %s26
  %s28 = sadd.s32 0, 0
  %s29 = smul.u32 16, %s28
  %p30 = scmp.lt.s32.totalorder %s29, 15
  %s31 = scalar_select %p30, %s29, 15
  %s32 = smul.addr %s31, 4
  %s33 = scalar_lea.vmem %s2, %s32
  %s34 = sadd.s32 0, 0
  %s35 = smul.u32 16, %s34
  %p36 = scmp.lt.s32.totalorder %s35, 15
  %s37 = scalar_select %p36, %s35, 15
  %s38 = smul.addr %s37, 4
  %s39 = scalar_lea.vmem %s0, %s38
  %s40 = sadd.s32 0, 0
  %s41 = smul.u32 16, %s40
  %s42 = sadd.s32 0, 0
  %s43 = smul.u32 16, %s42
  %p44 = scmp.lt.s32.totalorder %s43, 15
  %s45 = scalar_select %p44, %s43, 15
  %s46 = smul.addr %s45, 4
  %s47 = scalar_lea.vmem %s2, %s46
  %s48 = sadd.s32 0, 0
  %s49 = smul.u32 16, %s48
  %p51 = scmp.eq.s32.totalorder 0, 0
  // Predicated region
  $region10: #{basic_block_forward.4} parent=0 // pred_check
    %p52 = pneg %p51
  $region11: #{basic_block_forward.4} parent=0 // pred_check_branch
    %54 = sbr.rel (%p52) target = $region13
  $region12: #{basic_block_forward.4} parent=0 // pred_region
    %55 = vst [vmem:[%s3] sm:$0xff] 0.0
    %56 = vst [vmem:[%s4] sm:$0xff] 0.0
  $region13: #{basic_block_forward.4} parent=0 // pred_fallthru
    _
  %v57 = vld [vmem:[%s39] sm:$0xf]
  %v58 = vld [vmem:[%s39 + $0x4] sm:$0xf]
  %v59 = vld [vmem:[%s39 + $0x8] sm:$0xf]
  %v60 = vld [vmem:[%s39 + $0xc] sm:$0xf]
  %v61 = vld [vmem:[%s39 + $0x10] sm:$0xf]
  %v62 = vld [vmem:[%s39 + $0x14] sm:$0xf]
  %v63 = vld [vmem:[%s39 + $0x18] sm:$0xf]
  %v64 = vld [vmem:[%s39 + $0x1c] sm:$0xf]
  %v65 = vld [vmem:[%s39 + $0x20] sm:$0xf]
  %v66 = vld [vmem:[%s39 + $0x24] sm:$0xf]
  %v67 = vld [vmem:[%s39 + $0x28] sm:$0xf]
  %v68 = vld [vmem:[%s39 + $0x2c] sm:$0xf]
  %v69 = vld [vmem:[%s39 + $0x30] sm:$0xf]
  %v70 = vld [vmem:[%s39 + $0x34] sm:$0xf]
  %v71 = vld [vmem:[%s39 + $0x38] sm:$0xf]
  %v72 = vld [vmem:[%s39 + $0x3c] sm:$0xf]
  %v73 = vld [vmem:[%s1] sm:$0xf]
  %v74 = vld [vmem:[%s1 + $0x4] sm:$0xf]
  %v75 = vld [vmem:[%s1 + $0x8] sm:$0xf]
  %v76 = vld [vmem:[%s1 + $0xc] sm:$0xf]
  %v77 = vld [vmem:[%s1 + $0x10] sm:$0xf]
  %v78 = vld [vmem:[%s1 + $0x14] sm:$0xf]
  %v79 = vld [vmem:[%s1 + $0x18] sm:$0xf]
  %v80 = vld [vmem:[%s1 + $0x1c] sm:$0xf]
  %v81 = vld [vmem:[%s1 + $0x20] sm:$0xf]
  %v82 = vld [vmem:[%s1 + $0x24] sm:$0xf]
  %v83 = vld [vmem:[%s1 + $0x28] sm:$0xf]
  %v84 = vld [vmem:[%s1 + $0x2c] sm:$0xf]
  %v85 = vld [vmem:[%s1 + $0x30] sm:$0xf]
  %v86 = vld [vmem:[%s1 + $0x34] sm:$0xf]
  %v87 = vld [vmem:[%s1 + $0x38] sm:$0xf]
  %v88 = vld [vmem:[%s1 + $0x3c] sm:$0xf]
  %v105 = vunpack.c.l.b16 %v57
  %v106 = vunpack.c.l.b16 %v58
  %v107 = vunpack.c.l.b16 %v59
  %v108 = vunpack.c.l.b16 %v60
  %v109 = vunpack.c.l.b16 %v61
  %v110 = vunpack.c.l.b16 %v62
  %v111 = vunpack.c.l.b16 %v63
  %v112 = vunpack.c.l.b16 %v64
  %v113 = vunpack.c.l.b16 %v65
  %v114 = vunpack.c.l.b16 %v66
  %v115 = vunpack.c.l.b16 %v67
  %v116 = vunpack.c.l.b16 %v68
  %v117 = vunpack.c.l.b16 %v69
  %v118 = vunpack.c.l.b16 %v70
  %v119 = vunpack.c.l.b16 %v71
  %v120 = vunpack.c.l.b16 %v72
  %v121 = vpack.c.b16 %v106, %v105
  %v122 = vpack.c.b16 %v108, %v107
  %v123 = vpack.c.b16 %v110, %v109
  %v124 = vpack.c.b16 %v112, %v111
  %v125 = vpack.c.b16 %v114, %v113
  %v126 = vpack.c.b16 %v116, %v115
  %v127 = vpack.c.b16 %v118, %v117
  %v128 = vpack.c.b16 %v120, %v119
  %v153 = vunpack.c.l.b16 %v73
  %v154 = vunpack.c.l.b16 %v74
  %v155 = vunpack.c.l.b16 %v75
  %v156 = vunpack.c.l.b16 %v76
  %v157 = vunpack.c.l.b16 %v77
  %v158 = vunpack.c.l.b16 %v78
  %v159 = vunpack.c.l.b16 %v79
  %v160 = vunpack.c.l.b16 %v80
  %v161 = vunpack.c.l.b16 %v81
  %v162 = vunpack.c.l.b16 %v82
  %v163 = vunpack.c.l.b16 %v83
  %v164 = vunpack.c.l.b16 %v84
  %v165 = vunpack.c.l.b16 %v85
  %v166 = vunpack.c.l.b16 %v86
  %v167 = vunpack.c.l.b16 %v87
  %v168 = vunpack.c.l.b16 %v88
  %v169 = vpack.c.b16 %v154, %v153
  %v170 = vpack.c.b16 %v156, %v155
  %v171 = vpack.c.b16 %v158, %v157
  %v172 = vpack.c.b16 %v160, %v159
  %v173 = vpack.c.b16 %v162, %v161
  %v174 = vpack.c.b16 %v164, %v163
  %v175 = vpack.c.b16 %v166, %v165
  %v176 = vpack.c.b16 %v168, %v167
  %185 = vmatprep.subr.bf16.mxu0 0
  %186 = vmatpush1.bf16.msra.mxu0 %v169
  %187 = vmatprep.subr.bf16.mxu0 0
  %188 = vmatpush1.bf16.msra.mxu0 %v170
  %189 = vmatprep.subr.bf16.mxu0 0
  %190 = vmatpush1.bf16.msra.mxu0 %v171
  %191 = vmatprep.subr.bf16.mxu0 0
  %192 = vmatpush1.bf16.msra.mxu0 %v172
  %193 = vmatprep.subr.bf16.mxu0 0
  %194 = vmatpush1.bf16.msra.mxu0 %v173
  %195 = vmatprep.subr.bf16.mxu0 0
  %196 = vmatpush1.bf16.msra.mxu0 %v174
  %197 = vmatprep.subr.bf16.mxu0 0
  %198 = vmatpush1.bf16.msra.mxu0 %v175
  %199 = vmatprep.subr.bf16.mxu0 0
  %200 = vmatpush1.bf16.msra.mxu0 %v176
  %201 = vmatprep.subr.bf16.mxu0 0
  %202 = vmatpush1.bf16.msra.mxu0 0
  %203 = vmatprep.subr.bf16.mxu0 0
  %204 = vmatpush1.bf16.msra.mxu0 0
  %205 = vmatprep.subr.bf16.mxu0 0
  %206 = vmatpush1.bf16.msra.mxu0 0
  %207 = vmatprep.subr.bf16.mxu0 0
  %208 = vmatpush1.bf16.msra.mxu0 0
  %209 = vmatprep.subr.bf16.mxu0 0
  %210 = vmatpush1.bf16.msra.mxu0 0
  %211 = vmatprep.subr.bf16.mxu0 0
  %212 = vmatpush1.bf16.msra.mxu0 0
  %213 = vmatprep.subr.bf16.mxu0 0
  %214 = vmatpush1.bf16.msra.mxu0 0
  %215 = vmatprep.subr.bf16.mxu0 0
  %216 = vmatpush1.bf16.msra.mxu0 0
  %217 = vmatprep.mubr.bf16.mxu0 0
  %218 = vmatmul.mubr.bf16.gmra.mrb[0].mxu0 %v121
  %v219 = vpop.f32.mrb[0].mxu0
  %v220 = vadd.f32 0.0, %v219
  %v221 = vpop.f32.mrb[0].mxu0
  %v222 = vpop.f32.mrb[0].mxu0
  %v223 = vadd.f32 0.0, %v222
  %v224 = vpop.f32.mrb[0].mxu0
  %225 = vmatprep.mubr.bf16.mxu0 0
  %226 = vmatmul.mubr.bf16.gmra.mrb[0].mxu0 %v122
  %v227 = vpop.f32.mrb[0].mxu0
  %v228 = vadd.f32 0.0, %v227
  %v229 = vpop.f32.mrb[0].mxu0
  %v230 = vpop.f32.mrb[0].mxu0
  %v231 = vadd.f32 0.0, %v230
  %v232 = vpop.f32.mrb[0].mxu0
  %233 = vmatprep.mubr.bf16.mxu0 0
  %234 = vmatmul.mubr.bf16.gmra.mrb[0].mxu0 %v123
  %v235 = vpop.f32.mrb[0].mxu0
  %v236 = vadd.f32 0.0, %v235
  %v237 = vpop.f32.mrb[0].mxu0
  %v238 = vpop.f32.mrb[0].mxu0
  %v239 = vadd.f32 0.0, %v238
  %v240 = vpop.f32.mrb[0].mxu0
  %241 = vmatprep.mubr.bf16.mxu0 0
  %242 = vmatmul.mubr.bf16.gmra.mrb[0].mxu0 %v124
  %v243 = vpop.f32.mrb[0].mxu0
  %v244 = vadd.f32 0.0, %v243
  %v245 = vpop.f32.mrb[0].mxu0
  %v246 = vpop.f32.mrb[0].mxu0
  %v247 = vadd.f32 0.0, %v246
  %v248 = vpop.f32.mrb[0].mxu0
  %249 = vmatprep.mubr.bf16.mxu0 0
  %250 = vmatmul.mubr.bf16.gmra.mrb[0].mxu0 %v125
  %v251 = vpop.f32.mrb[0].mxu0
  %v252 = vadd.f32 0.0, %v251
  %v253 = vpop.f32.mrb[0].mxu0
  %v254 = vpop.f32.mrb[0].mxu0
  %v255 = vadd.f32 0.0, %v254
  %v256 = vpop.f32.mrb[0].mxu0
  %257 = vmatprep.mubr.bf16.mxu0 0
  %258 = vmatmul.mubr.bf16.gmra.mrb[0].mxu0 %v126
  %v259 = vpop.f32.mrb[0].mxu0
  %v260 = vadd.f32 0.0, %v259
  %v261 = vpop.f32.mrb[0].mxu0
  %v262 = vpop.f32.mrb[0].mxu0
  %v263 = vadd.f32 0.0, %v262
  %v264 = vpop.f32.mrb[0].mxu0
  %265 = vmatprep.mubr.bf16.mxu0 0
  %266 = vmatmul.mubr.bf16.gmra.mrb[0].mxu0 %v127
  %v267 = vpop.f32.mrb[0].mxu0
  %v268 = vadd.f32 0.0, %v267
  %v269 = vpop.f32.mrb[0].mxu0
  %v270 = vpop.f32.mrb[0].mxu0
  %v271 = vadd.f32 0.0, %v270
  %v272 = vpop.f32.mrb[0].mxu0
  %273 = vmatprep.mubr.bf16.mxu0 0
  %274 = vmatmul.mubr.bf16.gmra.mrb[0].mxu0 %v128
  %v275 = vpop.f32.mrb[0].mxu0
  %v276 = vadd.f32 0.0, %v275
  %v277 = vpop.f32.mrb[0].mxu0
  %v278 = vpop.f32.mrb[0].mxu0
  %v279 = vadd.f32 0.0, %v278
  %v280 = vpop.f32.mrb[0].mxu0
  %281 = vdwg.mxu0
  %v282 = vpack.c.bf16 %v223, %v220
  %v283 = vpack.c.bf16 %v231, %v228
  %v284 = vpack.c.bf16 %v239, %v236
  %v285 = vpack.c.bf16 %v247, %v244
  %v286 = vpack.c.bf16 %v255, %v252
  %v287 = vpack.c.bf16 %v263, %v260
  %v288 = vpack.c.bf16 %v271, %v268
  %v289 = vpack.c.bf16 %v279, %v276
  %v298 = vunpack.c.l.b16 %v282
  %v299 = vunpack.c.h.b16 %v282
  %v300 = vunpack.c.l.b16 %v283
  %v301 = vunpack.c.h.b16 %v283
  %v302 = vunpack.c.l.b16 %v284
  %v303 = vunpack.c.h.b16 %v284
  %v304 = vunpack.c.l.b16 %v285
  %v305 = vunpack.c.h.b16 %v285
  %v306 = vunpack.c.l.b16 %v286
  %v307 = vunpack.c.h.b16 %v286
  %v308 = vunpack.c.l.b16 %v287
  %v309 = vunpack.c.h.b16 %v287
  %v310 = vunpack.c.l.b16 %v288
  %v311 = vunpack.c.h.b16 %v288
  %v312 = vunpack.c.l.b16 %v289
  %v313 = vunpack.c.h.b16 %v289
  %v314 = vpack.c.b16 %v298, %v298
  %v315 = vpack.c.b16 %v299, %v299
  %v316 = vpack.c.b16 %v300, %v300
  %v317 = vpack.c.b16 %v301, %v301
  %v318 = vpack.c.b16 %v302, %v302
  %v319 = vpack.c.b16 %v303, %v303
  %v320 = vpack.c.b16 %v304, %v304
  %v321 = vpack.c.b16 %v305, %v305
  %v322 = vpack.c.b16 %v306, %v306
  %v323 = vpack.c.b16 %v307, %v307
  %v324 = vpack.c.b16 %v308, %v308
  %v325 = vpack.c.b16 %v309, %v309
  %v326 = vpack.c.b16 %v310, %v310
  %v327 = vpack.c.b16 %v311, %v311
  %v328 = vpack.c.b16 %v312, %v312
  %v329 = vpack.c.b16 %v313, %v313
  %346 = vst [vmem:[%s47] sm:$0xf] %v314
  %347 = vst [vmem:[%s47 + $0x4] sm:$0xf] %v315
  %348 = vst [vmem:[%s47 + $0x8] sm:$0xf] %v316
  %349 = vst [vmem:[%s47 + $0xc] sm:$0xf] %v317
  %350 = vst [vmem:[%s47 + $0x10] sm:$0xf] %v318
  %351 = vst [vmem:[%s47 + $0x14] sm:$0xf] %v319
  %352 = vst [vmem:[%s47 + $0x18] sm:$0xf] %v320
  %353 = vst [vmem:[%s47 + $0x1c] sm:$0xf] %v321
  %354 = vst [vmem:[%s47 + $0x20] sm:$0xf] %v322
  %355 = vst [vmem:[%s47 + $0x24] sm:$0xf] %v323
  %356 = vst [vmem:[%s47 + $0x28] sm:$0xf] %v324
  %357 = vst [vmem:[%s47 + $0x2c] sm:$0xf] %v325
  %358 = vst [vmem:[%s47 + $0x30] sm:$0xf] %v326
  %359 = vst [vmem:[%s47 + $0x34] sm:$0xf] %v327
  %360 = vst [vmem:[%s47 + $0x38] sm:$0xf] %v328
  %361 = vst [vmem:[%s47 + $0x3c] sm:$0xf] %v329
  %v362 = vld [vmem:[%s3] sm:$0xff]
  %v363 = vadd.f32 %v220, %v223
  %v364 = vadd.f32 %v363, %v228
  %v365 = vadd.f32 %v364, %v231
  %v366 = vadd.f32 %v365, %v236
  %v367 = vadd.f32 %v366, %v239
  %v368 = vadd.f32 %v367, %v244
  %v369 = vadd.f32 %v368, %v247
  %v370 = vadd.f32 %v369, %v252
  %v371 = vadd.f32 %v370, %v255
  %v372 = vadd.f32 %v371, %v260
  %v373 = vadd.f32 %v372, %v263
  %v374 = vadd.f32 %v373, %v268
  %v375 = vadd.f32 %v374, %v271
  %v376 = vadd.f32 %v375, %v276
  %v377 = vadd.f32 %v376, %v279
  %v378 = vadd.f32 %v362, %v377
  %379 = vst [vmem:[%s3] sm:$0xff] %v378
  %v380 = vld [vmem:[%s4] sm:$0xff]
  %v381 = vmul.f32 %v220, %v220
  %v382 = vmul.f32 %v223, %v223
  %v383 = vmul.f32 %v228, %v228
  %v384 = vmul.f32 %v231, %v231
  %v385 = vmul.f32 %v236, %v236
  %v386 = vmul.f32 %v239, %v239
  %v387 = vmul.f32 %v244, %v244
  %v388 = vmul.f32 %v247, %v247
  %v389 = vmul.f32 %v252, %v252
  %v390 = vmul.f32 %v255, %v255
  %v391 = vmul.f32 %v260, %v260
  %v392 = vmul.f32 %v263, %v263
  %v393 = vmul.f32 %v268, %v268
  %v394 = vmul.f32 %v271, %v271
  %v395 = vmul.f32 %v276, %v276
  %v396 = vmul.f32 %v279, %v279
  %v397 = vadd.f32 %v381, %v382
  %v398 = vadd.f32 %v397, %v383
  %v399 = vadd.f32 %v398, %v384
  %v400 = vadd.f32 %v399, %v385
  %v401 = vadd.f32 %v400, %v386
  %v402 = vadd.f32 %v401, %v387
  %v403 = vadd.f32 %v402, %v388
  %v404 = vadd.f32 %v403, %v389
  %v405 = vadd.f32 %v404, %v390
  %v406 = vadd.f32 %v405, %v391
  %v407 = vadd.f32 %v406, %v392
  %v408 = vadd.f32 %v407, %v393
  %v409 = vadd.f32 %v408, %v394
  %v410 = vadd.f32 %v409, %v395
  %v411 = vadd.f32 %v410, %v396
  %v412 = vadd.f32 %v380, %v411
  %413 = vst [vmem:[%s4] sm:$0xff] %v412
  %s414 = sadd.s32 0, 0
  %s415 = smul.u32 16, %s414
  %p416 = scmp.lt.s32.totalorder %s415, 15
  %s417 = scalar_select %p416, %s415, 15
  %s418 = smul.addr %s417, 4
  %s419 = scalar_lea.vmem %s2, %s418
  // Predicated region
  $region14: #{basic_block_forward.4} parent=0 // pred_check
    _
  $region15: #{basic_block_forward.4} parent=0 // pred_check_branch
    %421 = sbr.rel (0) target = $region17
  $region16: #{basic_block_forward.4} parent=0 // pred_region
    %s422 = sadd.s32 0, 0
    %s423 = smul.u32 16, %s422
  $region17: #{basic_block_forward.4} parent=0 // pred_fallthru
    _
  // Predicated region
  $region18: #{basic_block_forward.4} parent=0 // pred_check
    _
  $region19: #{basic_block_forward.4} parent=0 // pred_check_branch
    %425 = sbr.rel (0) target = $region21
  $region20: #{basic_block_forward.4} parent=0 // pred_region
    _
  $region21: #{basic_block_forward.4} parent=0 // pred_fallthru
    _
  // Predicated region
  $region22: #{basic_block_forward.4} parent=0 // pred_check
    _
  $region23: #{basic_block_forward.4} parent=0 // pred_check_branch
    %427 = sbr.rel (0) target = $region25
  $region24: #{basic_block_forward.4} parent=0 // pred_region
    _
  $region25: #{basic_block_forward.4} parent=0 // pred_fallthru
    _
  // Predicated region
  $region26: #{basic_block_forward.4} parent=0 // pred_check
    _
  $region27: #{basic_block_forward.4} parent=0 // pred_check_branch
    %429 = sbr.rel (0) target = $region29
  $region28: #{basic_block_forward.4} parent=0 // pred_region
    %s430 = sadd.s32 0, 0
    %s431 = smul.u32 16, %s430
    %p432 = scmp.lt.s32.totalorder %s431, 15
    %s433 = scalar_select %p432, %s431, 15
    %s434 = smul.addr %s433, 4
    %s435 = scalar_lea.vmem %s2, %s434
  $region29: #{basic_block_forward.4} parent=0 // pred_fallthru
    _
  // Predicated region
  $region30: #{basic_block_forward.4} parent=0 // pred_check
    _
  $region31: #{basic_block_forward.4} parent=0 // pred_check_branch
    %437 = sbr.rel (0) target = $region33
  $region32: #{basic_block_forward.4} parent=0 // pred_region
    _
  $region33: #{basic_block_forward.4} parent=0 // pred_fallthru
    _
  // Predicated region
  $region34: #{basic_block_forward.4} parent=0 // pred_check
    _
  $region35: #{basic_block_forward.4} parent=0 // pred_check_branch
    %439 = sbr.rel (0) target = $region37
  $region36: #{basic_block_forward.4} parent=0 // pred_region
    _
  $region37: #{basic_block_forward.4} parent=0 // pred_fallthru
    _

// kernel: basic_block_forward.7
$region0: #{basic_block_forward.7}
  #allocation0 [shape = 'u32[]', space=smem, size = 0x4, offset = 0x4, fixed_abs, tag = 'smem constant byte address 0x4 - core index']
  #allocation1 [shape = 'u32[144,128]{1,0:T(1,128)}', space=vmem, size = 0x12000, scoped, tag = 'internal scratch']
  %s0 = inlined_call_operand.vmem [shape: bf16[128,128], index: 0, kind: input, shape index: {}]
  %s1 = inlined_call_operand.vmem [shape: f32[1,128], index: 1, kind: input, shape index: {}]
  %s2 = inlined_call_operand.vmem [shape: f32[1,128], index: 2, kind: input, shape index: {}]
  %s3 = inlined_call_operand.vmem [shape: bf16[128,128], index: 3, kind: input, shape index: {}]
  %s4 = inlined_call_operand.vmem [shape: f32[1,128], index: 4, kind: input, shape index: {}]
  %s5 = inlined_call_operand.vmem [shape: f32[1,128], index: 5, kind: input, shape index: {}]
  %s6 = inlined_call_operand.vmem [shape: f32[128,128], index: 6, kind: output, shape index: {}]
  %s7 = sld [smem:[#allocation0]]
  $region34: #{basic_block_forward.7} parent=0
    _
  %s9 = ssub.s32 1, %s7
  %s10 = scalar_select 0, %s9, %s7
  // Predicated region
  $region2: #{basic_block_forward.7} parent=0 // pred_check
    _
  $region3: #{basic_block_forward.7} parent=0 // pred_check_branch
    %12 = sbr.rel (0) target = $region5
  $region4: #{basic_block_forward.7} parent=0 // pred_region
    _
  $region5: #{basic_block_forward.7} parent=0 // pred_fallthru
    _
  // Predicated region
  $region6: #{basic_block_forward.7} parent=0 // pred_check
    _
  $region7: #{basic_block_forward.7} parent=0 // pred_check_branch
    %14 = sbr.rel (0) target = $region9
  $region8: #{basic_block_forward.7} parent=0 // pred_region
    _
  $region9: #{basic_block_forward.7} parent=0 // pred_fallthru
    _
  // Predicated region
  $region10: #{basic_block_forward.7} parent=0 // pred_check
    _
  $region11: #{basic_block_forward.7} parent=0 // pred_check_branch
    %16 = sbr.rel (0) target = $region13
  $region12: #{basic_block_forward.7} parent=0 // pred_region
    _
  $region13: #{basic_block_forward.7} parent=0 // pred_fallthru
    _
  // Predicated region
  $region14: #{basic_block_forward.7} parent=0 // pred_check
    _
  $region15: #{basic_block_forward.7} parent=0 // pred_check_branch
    %18 = sbr.rel (0) target = $region17
  $region16: #{basic_block_forward.7} parent=0 // pred_region
    _
  $region17: #{basic_block_forward.7} parent=0 // pred_fallthru
    _
  // Predicated region
  $region18: #{basic_block_forward.7} parent=0 // pred_check
    _
  $region19: #{basic_block_forward.7} parent=0 // pred_check_branch
    %20 = sbr.rel (0) target = $region21
  $region20: #{basic_block_forward.7} parent=0 // pred_region
    _
  $region21: #{basic_block_forward.7} parent=0 // pred_fallthru
    _
  // Predicated region
  $region22: #{basic_block_forward.7} parent=0 // pred_check
    _
  $region23: #{basic_block_forward.7} parent=0 // pred_check_branch
    %22 = sbr.rel (0) target = $region25
  $region24: #{basic_block_forward.7} parent=0 // pred_region
    _
  $region25: #{basic_block_forward.7} parent=0 // pred_fallthru
    _
  %v23 = vld [vmem:[%s0] sm:$0xf]
  %v24 = vld [vmem:[%s0 + $0x4] sm:$0xf]
  %v25 = vld [vmem:[%s0 + $0x8] sm:$0xf]
  %v26 = vld [vmem:[%s0 + $0xc] sm:$0xf]
  %v27 = vld [vmem:[%s0 + $0x10] sm:$0xf]
  %v28 = vld [vmem:[%s0 + $0x14] sm:$0xf]
  %v29 = vld [vmem:[%s0 + $0x18] sm:$0xf]
  %v30 = vld [vmem:[%s0 + $0x1c] sm:$0xf]
  %v31 = vld [vmem:[%s0 + $0x20] sm:$0xf]
  %v32 = vld [vmem:[%s0 + $0x24] sm:$0xf]
  %v33 = vld [vmem:[%s0 + $0x28] sm:$0xf]
  %v34 = vld [vmem:[%s0 + $0x2c] sm:$0xf]
  %v35 = vld [vmem:[%s0 + $0x30] sm:$0xf]
  %v36 = vld [vmem:[%s0 + $0x34] sm:$0xf]
  %v37 = vld [vmem:[%s0 + $0x38] sm:$0xf]
  %v38 = vld [vmem:[%s0 + $0x3c] sm:$0xf]
  %v39 = vunpack.c.l.bf16 %v23
  %v40 = vunpack.c.l.bf16 %v24
  %v41 = vunpack.c.l.bf16 %v25
  %v42 = vunpack.c.l.bf16 %v26
  %v43 = vunpack.c.l.bf16 %v27
  %v44 = vunpack.c.l.bf16 %v28
  %v45 = vunpack.c.l.bf16 %v29
  %v46 = vunpack.c.l.bf16 %v30
  %v47 = vunpack.c.l.bf16 %v31
  %v48 = vunpack.c.l.bf16 %v32
  %v49 = vunpack.c.l.bf16 %v33
  %v50 = vunpack.c.l.bf16 %v34
  %v51 = vunpack.c.l.bf16 %v35
  %v52 = vunpack.c.l.bf16 %v36
  %v53 = vunpack.c.l.bf16 %v37
  %v54 = vunpack.c.l.bf16 %v38
  %v55 = vld [vmem:[%s3] sm:$0xf]
  %v56 = vld [vmem:[%s3 + $0x4] sm:$0xf]
  %v57 = vld [vmem:[%s3 + $0x8] sm:$0xf]
  %v58 = vld [vmem:[%s3 + $0xc] sm:$0xf]
  %v59 = vld [vmem:[%s3 + $0x10] sm:$0xf]
  %v60 = vld [vmem:[%s3 + $0x14] sm:$0xf]
  %v61 = vld [vmem:[%s3 + $0x18] sm:$0xf]
  %v62 = vld [vmem:[%s3 + $0x1c] sm:$0xf]
  %v63 = vld [vmem:[%s3 + $0x20] sm:$0xf]
  %v64 = vld [vmem:[%s3 + $0x24] sm:$0xf]
  %v65 = vld [vmem:[%s3 + $0x28] sm:$0xf]
  %v66 = vld [vmem:[%s3 + $0x2c] sm:$0xf]
  %v67 = vld [vmem:[%s3 + $0x30] sm:$0xf]
  %v68 = vld [vmem:[%s3 + $0x34] sm:$0xf]
  %v69 = vld [vmem:[%s3 + $0x38] sm:$0xf]
  %v70 = vld [vmem:[%s3 + $0x3c] sm:$0xf]
  %v71 = vunpack.c.l.bf16 %v55
  %v72 = vunpack.c.l.bf16 %v56
  %v73 = vunpack.c.l.bf16 %v57
  %v74 = vunpack.c.l.bf16 %v58
  %v75 = vunpack.c.l.bf16 %v59
  %v76 = vunpack.c.l.bf16 %v60
  %v77 = vunpack.c.l.bf16 %v61
  %v78 = vunpack.c.l.bf16 %v62
  %v79 = vunpack.c.l.bf16 %v63
  %v80 = vunpack.c.l.bf16 %v64
  %v81 = vunpack.c.l.bf16 %v65
  %v82 = vunpack.c.l.bf16 %v66
  %v83 = vunpack.c.l.bf16 %v67
  %v84 = vunpack.c.l.bf16 %v68
  %v85 = vunpack.c.l.bf16 %v69
  %v86 = vunpack.c.l.bf16 %v70
  %v87 = vld [vmem:[%s1] sm:$0x1]
  %v89 = vlaneseq
  %v90 = vshrl.u32 %v89, 7
  %v91 = vsub.s32 0, %v90
  %v92 = vrot.slane %v87, %v91
  %v94 = vmul.f32 %v39, %v92
  %v95 = vmul.f32 %v40, %v92
  %v96 = vmul.f32 %v41, %v92
  %v97 = vmul.f32 %v42, %v92
  %v98 = vmul.f32 %v43, %v92
  %v99 = vmul.f32 %v44, %v92
  %v100 = vmul.f32 %v45, %v92
  %v101 = vmul.f32 %v46, %v92
  %v102 = vmul.f32 %v47, %v92
  %v103 = vmul.f32 %v48, %v92
  %v104 = vmul.f32 %v49, %v92
  %v105 = vmul.f32 %v50, %v92
  %v106 = vmul.f32 %v51, %v92
  %v107 = vmul.f32 %v52, %v92
  %v108 = vmul.f32 %v53, %v92
  %v109 = vmul.f32 %v54, %v92
  %v110 = vld [vmem:[%s2] sm:$0x1]
  %v112 = vlaneseq
  %v113 = vshrl.u32 %v112, 7
  %v114 = vsub.s32 0, %v113
  %v115 = vrot.slane %v110, %v114
  %v117 = vadd.f32 %v94, %v115
  %v118 = vadd.f32 %v95, %v115
  %v119 = vadd.f32 %v96, %v115
  %v120 = vadd.f32 %v97, %v115
  %v121 = vadd.f32 %v98, %v115
  %v122 = vadd.f32 %v99, %v115
  %v123 = vadd.f32 %v100, %v115
  %v124 = vadd.f32 %v101, %v115
  %v125 = vadd.f32 %v102, %v115
  %v126 = vadd.f32 %v103, %v115
  %v127 = vadd.f32 %v104, %v115
  %v128 = vadd.f32 %v105, %v115
  %v129 = vadd.f32 %v106, %v115
  %v130 = vadd.f32 %v107, %v115
  %v131 = vadd.f32 %v108, %v115
  %v132 = vadd.f32 %v109, %v115
  %v133 = vld [vmem:[%s4] sm:$0x1]
  %v135 = vlaneseq
  %v136 = vshrl.u32 %v135, 7
  %v137 = vsub.s32 0, %v136
  %v138 = vrot.slane %v133, %v137
  %v140 = vmul.f32 %v71, %v138
  %v141 = vmul.f32 %v72, %v138
  %v142 = vmul.f32 %v73, %v138
  %v143 = vmul.f32 %v74, %v138
  %v144 = vmul.f32 %v75, %v138
  %v145 = vmul.f32 %v76, %v138
  %v146 = vmul.f32 %v77, %v138
  %v147 = vmul.f32 %v78, %v138
  %v148 = vmul.f32 %v79, %v138
  %v149 = vmul.f32 %v80, %v138
  %v150 = vmul.f32 %v81, %v138
  %v151 = vmul.f32 %v82, %v138
  %v152 = vmul.f32 %v83, %v138
  %v153 = vmul.f32 %v84, %v138
  %v154 = vmul.f32 %v85, %v138
  %v155 = vmul.f32 %v86, %v138
  %v156 = vld [vmem:[%s5] sm:$0x1]
  %v158 = vlaneseq
  %v159 = vshrl.u32 %v158, 7
  %v160 = vsub.s32 0, %v159
  %v161 = vrot.slane %v156, %v160
  %v163 = vadd.f32 %v140, %v161
  %v164 = vadd.f32 %v141, %v161
  %v165 = vadd.f32 %v142, %v161
  %v166 = vadd.f32 %v143, %v161
  %v167 = vadd.f32 %v144, %v161
  %v168 = vadd.f32 %v145, %v161
  %v169 = vadd.f32 %v146, %v161
  %v170 = vadd.f32 %v147, %v161
  %v171 = vadd.f32 %v148, %v161
  %v172 = vadd.f32 %v149, %v161
  %v173 = vadd.f32 %v150, %v161
  %v174 = vadd.f32 %v151, %v161
  %v175 = vadd.f32 %v152, %v161
  %v176 = vadd.f32 %v153, %v161
  %v177 = vadd.f32 %v154, %v161
  %v178 = vadd.f32 %v155, %v161
  %v179 = vadd.f32 %v117, %v163
  %v180 = vadd.f32 %v118, %v164
  %v181 = vadd.f32 %v119, %v165
  %v182 = vadd.f32 %v120, %v166
  %v183 = vadd.f32 %v121, %v167
  %v184 = vadd.f32 %v122, %v168
  %v185 = vadd.f32 %v123, %v169
  %v186 = vadd.f32 %v124, %v170
  %v187 = vadd.f32 %v125, %v171
  %v188 = vadd.f32 %v126, %v172
  %v189 = vadd.f32 %v127, %v173
  %v190 = vadd.f32 %v128, %v174
  %v191 = vadd.f32 %v129, %v175
  %v192 = vadd.f32 %v130, %v176
  %v193 = vadd.f32 %v131, %v177
  %v194 = vadd.f32 %v132, %v178
  %v195 = vmax.f32 %v179, 0.0
  %v196 = vmax.f32 %v180, 0.0
  %v197 = vmax.f32 %v181, 0.0
  %v198 = vmax.f32 %v182, 0.0
  %v199 = vmax.f32 %v183, 0.0
  %v200 = vmax.f32 %v184, 0.0
  %v201 = vmax.f32 %v185, 0.0
  %v202 = vmax.f32 %v186, 0.0
  %v203 = vmax.f32 %v187, 0.0
  %v204 = vmax.f32 %v188, 0.0
  %v205 = vmax.f32 %v189, 0.0
  %v206 = vmax.f32 %v190, 0.0
  %v207 = vmax.f32 %v191, 0.0
  %v208 = vmax.f32 %v192, 0.0
  %v209 = vmax.f32 %v193, 0.0
  %v210 = vmax.f32 %v194, 0.0
  %211 = vst [vmem:[%s6] sm:$0xff] %v195
  %212 = vst [vmem:[%s6 + $0x8] sm:$0xff] %v196
  %213 = vst [vmem:[%s6 + $0x10] sm:$0xff] %v197
  %214 = vst [vmem:[%s6 + $0x18] sm:$0xff] %v198
  %215 = vst [vmem:[%s6 + $0x20] sm:$0xff] %v199
  %216 = vst [vmem:[%s6 + $0x28] sm:$0xff] %v200
  %217 = vst [vmem:[%s6 + $0x30] sm:$0xff] %v201
  %218 = vst [vmem:[%s6 + $0x38] sm:$0xff] %v202
  %219 = vst [vmem:[%s6 + $0x40] sm:$0xff] %v203
  %220 = vst [vmem:[%s6 + $0x48] sm:$0xff] %v204
  %221 = vst [vmem:[%s6 + $0x50] sm:$0xff] %v205
  %222 = vst [vmem:[%s6 + $0x58] sm:$0xff] %v206
  %223 = vst [vmem:[%s6 + $0x60] sm:$0xff] %v207
  %224 = vst [vmem:[%s6 + $0x68] sm:$0xff] %v208
  %225 = vst [vmem:[%s6 + $0x70] sm:$0xff] %v209
  %226 = vst [vmem:[%s6 + $0x78] sm:$0xff] %v210
  // Predicated region
  $region26: #{basic_block_forward.7} parent=0 // pred_check
    _
  $region27: #{basic_block_forward.7} parent=0 // pred_check_branch
    %228 = sbr.rel (0) target = $region29
  $region28: #{basic_block_forward.7} parent=0 // pred_region
    _
  $region29: #{basic_block_forward.7} parent=0 // pred_fallthru
    _
  // Predicated region
  $region30: #{basic_block_forward.7} parent=0 // pred_check
    _
  $region31: #{basic_block_forward.7} parent=0 // pred_check_branch
    %230 = sbr.rel (0) target = $region33
  $region32: #{basic_block_forward.7} parent=0 // pred_region
    _
  $region33: #{basic_block_forward.7} parent=0 // pred_fallthru
    _

// kernel: basic_block_forward.6
$region0: #{basic_block_forward.6}
  #allocation0 [shape = 'u32[]', space=smem, size = 0x4, offset = 0x4, fixed_abs, tag = 'smem constant byte address 0x4 - core index']
  #allocation1 [shape = 'u32[144,128]{1,0:T(1,128)}', space=vmem, size = 0x12000, scoped, tag = 'internal scratch']
  %s0 = inlined_call_operand.vmem [shape: bf16[128,128], index: 0, kind: input, shape index: {}]
  %s1 = inlined_call_operand.vmem [shape: bf16[128,128], index: 1, kind: input, shape index: {}]
  %s2 = inlined_call_operand.vmem [shape: bf16[128,128], index: 2, kind: input, shape index: {}]
  %s3 = inlined_call_operand.vmem [shape: bf16[128,128], index: 3, kind: input, shape index: {}]
  %s4 = inlined_call_operand.vmem [shape: bf16[128,128], index: 4, kind: output, shape index: {0}]
  %s5 = inlined_call_operand.vmem [shape: bf16[128,128], index: 5, kind: output, shape index: {1}]
  %s6 = inlined_call_operand.vmem [shape: f32[8,128], index: 6, kind: output, shape index: {2}]
  %s7 = inlined_call_operand.vmem [shape: f32[8,128], index: 7, kind: output, shape index: {3}]
  %s8 = inlined_call_operand.vmem [shape: f32[8,128], index: 8, kind: output, shape index: {4}]
  %s9 = inlined_call_operand.vmem [shape: f32[8,128], index: 9, kind: output, shape index: {5}]
  %10 = xla_tuple %s4, %s5, %s6, %s7, %s8, %s9
  %s11 = sld [smem:[#allocation0]]
  $region70: #{basic_block_forward.6} parent=0
    _
  %s13 = ssub.s32 1, %s11
  %s14 = scalar_select 0, %s13, %s11
  // Predicated region
  $region2: #{basic_block_forward.6} parent=0 // pred_check
    _
  $region3: #{basic_block_forward.6} parent=0 // pred_check_branch
    %16 = sbr.rel (0) target = $region5
  $region4: #{basic_block_forward.6} parent=0 // pred_region
    %s17 = sadd.s32 0, 0
    %s18 = smul.u32 16, %s17
    %p19 = scmp.lt.s32.totalorder %s18, 15
    %s20 = scalar_select %p19, %s18, 15
    %s21 = smul.addr %s20, 4
    %s22 = scalar_lea.vmem %s0, %s21
    %s23 = sadd.s32 0, 0
    %s24 = smul.u32 16, %s23
  $region5: #{basic_block_forward.6} parent=0 // pred_fallthru
    _
  // Predicated region
  $region6: #{basic_block_forward.6} parent=0 // pred_check
    _
  $region7: #{basic_block_forward.6} parent=0 // pred_check_branch
    %26 = sbr.rel (0) target = $region9
  $region8: #{basic_block_forward.6} parent=0 // pred_region
    _
  $region9: #{basic_block_forward.6} parent=0 // pred_fallthru
    _
  // Predicated region
  $region10: #{basic_block_forward.6} parent=0 // pred_check
    _
  $region11: #{basic_block_forward.6} parent=0 // pred_check_branch
    %28 = sbr.rel (0) target = $region13
  $region12: #{basic_block_forward.6} parent=0 // pred_region
    %s29 = sadd.s32 0, 0
    %s30 = smul.u32 16, %s29
    %p31 = scmp.lt.s32.totalorder %s30, 15
    %s32 = scalar_select %p31, %s30, 15
    %s33 = smul.addr %s32, 4
    %s34 = scalar_lea.vmem %s2, %s33
    %s35 = sadd.s32 0, 0
    %s36 = smul.u32 16, %s35
  $region13: #{basic_block_forward.6} parent=0 // pred_fallthru
    _
  // Predicated region
  $region14: #{basic_block_forward.6} parent=0 // pred_check
    _
  $region15: #{basic_block_forward.6} parent=0 // pred_check_branch
    %38 = sbr.rel (0) target = $region17
  $region16: #{basic_block_forward.6} parent=0 // pred_region
    _
  $region17: #{basic_block_forward.6} parent=0 // pred_fallthru
    _
  %s39 = sadd.s32 0, 0
  %s40 = smul.u32 16, %s39
  %p41 = scmp.lt.s32.totalorder %s40, 15
  %s42 = scalar_select %p41, %s40, 15
  %s43 = smul.addr %s42, 4
  %s44 = scalar_lea.vmem %s0, %s43
  %s45 = sadd.s32 0, 0
  %s46 = smul.u32 16, %s45
  %p47 = scmp.lt.s32.totalorder %s46, 15
  %s48 = scalar_select %p47, %s46, 15
  %s49 = smul.addr %s48, 4
  %s50 = scalar_lea.vmem %s2, %s49
  %s51 = sadd.s32 0, 0
  %s52 = smul.u32 16, %s51
  %p53 = scmp.lt.s32.totalorder %s52, 15
  %s54 = scalar_select %p53, %s52, 15
  %s55 = smul.addr %s54, 4
  %s56 = scalar_lea.vmem %s4, %s55
  %s57 = sadd.s32 0, 0
  %s58 = smul.u32 16, %s57
  %p59 = scmp.lt.s32.totalorder %s58, 15
  %s60 = scalar_select %p59, %s58, 15
  %s61 = smul.addr %s60, 4
  %s62 = scalar_lea.vmem %s5, %s61
  %s63 = sadd.s32 0, 0
  %s64 = smul.u32 16, %s63
  %p65 = scmp.lt.s32.totalorder %s64, 15
  %s66 = scalar_select %p65, %s64, 15
  %s67 = smul.addr %s66, 4
  %s68 = scalar_lea.vmem %s0, %s67
  %s69 = sadd.s32 0, 0
  %s70 = smul.u32 16, %s69
  %s71 = sadd.s32 0, 0
  %s72 = smul.u32 16, %s71
  %p73 = scmp.lt.s32.totalorder %s72, 15
  %s74 = scalar_select %p73, %s72, 15
  %s75 = smul.addr %s74, 4
  %s76 = scalar_lea.vmem %s2, %s75
  %s77 = sadd.s32 0, 0
  %s78 = smul.u32 16, %s77
  %s79 = sadd.s32 0, 0
  %s80 = smul.u32 16, %s79
  %p81 = scmp.lt.s32.totalorder %s80, 15
  %s82 = scalar_select %p81, %s80, 15
  %s83 = smul.addr %s82, 4
  %s84 = scalar_lea.vmem %s4, %s83
  %s85 = sadd.s32 0, 0
  %s86 = smul.u32 16, %s85
  %s87 = sadd.s32 0, 0
  %s88 = smul.u32 16, %s87
  %p89 = scmp.lt.s32.totalorder %s88, 15
  %s90 = scalar_select %p89, %s88, 15
  %s91 = smul.addr %s90, 4
  %s92 = scalar_lea.vmem %s5, %s91
  %s93 = sadd.s32 0, 0
  %s94 = smul.u32 16, %s93
  %p96 = scmp.eq.s32.totalorder 0, 0
  // Predicated region
  $region18: #{basic_block_forward.6} parent=0 // pred_check
    %p97 = pneg %p96
  $region19: #{basic_block_forward.6} parent=0 // pred_check_branch
    %99 = sbr.rel (%p97) target = $region21
  $region20: #{basic_block_forward.6} parent=0 // pred_region
    %100 = vst [vmem:[%s6] sm:$0xff] 0.0
    %101 = vst [vmem:[%s7] sm:$0xff] 0.0
    %102 = vst [vmem:[%s8] sm:$0xff] 0.0
    %103 = vst [vmem:[%s9] sm:$0xff] 0.0
  $region21: #{basic_block_forward.6} parent=0 // pred_fallthru
    _
  %v104 = vld [vmem:[%s68] sm:$0xf]
  %v105 = vld [vmem:[%s68 + $0x4] sm:$0xf]
  %v106 = vld [vmem:[%s68 + $0x8] sm:$0xf]
  %v107 = vld [vmem:[%s68 + $0xc] sm:$0xf]
  %v108 = vld [vmem:[%s68 + $0x10] sm:$0xf]
  %v109 = vld [vmem:[%s68 + $0x14] sm:$0xf]
  %v110 = vld [vmem:[%s68 + $0x18] sm:$0xf]
  %v111 = vld [vmem:[%s68 + $0x1c] sm:$0xf]
  %v112 = vld [vmem:[%s68 + $0x20] sm:$0xf]
  %v113 = vld [vmem:[%s68 + $0x24] sm:$0xf]
  %v114 = vld [vmem:[%s68 + $0x28] sm:$0xf]
  %v115 = vld [vmem:[%s68 + $0x2c] sm:$0xf]
  %v116 = vld [vmem:[%s68 + $0x30] sm:$0xf]
  %v117 = vld [vmem:[%s68 + $0x34] sm:$0xf]
  %v118 = vld [vmem:[%s68 + $0x38] sm:$0xf]
  %v119 = vld [vmem:[%s68 + $0x3c] sm:$0xf]
  %v120 = vld [vmem:[%s1] sm:$0xf]
  %v121 = vld [vmem:[%s1 + $0x4] sm:$0xf]
  %v122 = vld [vmem:[%s1 + $0x8] sm:$0xf]
  %v123 = vld [vmem:[%s1 + $0xc] sm:$0xf]
  %v124 = vld [vmem:[%s1 + $0x10] sm:$0xf]
  %v125 = vld [vmem:[%s1 + $0x14] sm:$0xf]
  %v126 = vld [vmem:[%s1 + $0x18] sm:$0xf]
  %v127 = vld [vmem:[%s1 + $0x1c] sm:$0xf]
  %v128 = vld [vmem:[%s1 + $0x20] sm:$0xf]
  %v129 = vld [vmem:[%s1 + $0x24] sm:$0xf]
  %v130 = vld [vmem:[%s1 + $0x28] sm:$0xf]
  %v131 = vld [vmem:[%s1 + $0x2c] sm:$0xf]
  %v132 = vld [vmem:[%s1 + $0x30] sm:$0xf]
  %v133 = vld [vmem:[%s1 + $0x34] sm:$0xf]
  %v134 = vld [vmem:[%s1 + $0x38] sm:$0xf]
  %v135 = vld [vmem:[%s1 + $0x3c] sm:$0xf]
  %v152 = vunpack.c.l.b16 %v104
  %v153 = vunpack.c.l.b16 %v105
  %v154 = vunpack.c.l.b16 %v106
  %v155 = vunpack.c.l.b16 %v107
  %v156 = vunpack.c.l.b16 %v108
  %v157 = vunpack.c.l.b16 %v109
  %v158 = vunpack.c.l.b16 %v110
  %v159 = vunpack.c.l.b16 %v111
  %v160 = vunpack.c.l.b16 %v112
  %v161 = vunpack.c.l.b16 %v113
  %v162 = vunpack.c.l.b16 %v114
  %v163 = vunpack.c.l.b16 %v115
  %v164 = vunpack.c.l.b16 %v116
  %v165 = vunpack.c.l.b16 %v117
  %v166 = vunpack.c.l.b16 %v118
  %v167 = vunpack.c.l.b16 %v119
  %v168 = vpack.c.b16 %v153, %v152
  %v169 = vpack.c.b16 %v155, %v154
  %v170 = vpack.c.b16 %v157, %v156
  %v171 = vpack.c.b16 %v159, %v158
  %v172 = vpack.c.b16 %v161, %v160
  %v173 = vpack.c.b16 %v163, %v162
  %v174 = vpack.c.b16 %v165, %v164
  %v175 = vpack.c.b16 %v167, %v166
  %v200 = vunpack.c.l.b16 %v120
  %v201 = vunpack.c.l.b16 %v121
  %v202 = vunpack.c.l.b16 %v122
  %v203 = vunpack.c.l.b16 %v123
  %v204 = vunpack.c.l.b16 %v124
  %v205 = vunpack.c.l.b16 %v125
  %v206 = vunpack.c.l.b16 %v126
  %v207 = vunpack.c.l.b16 %v127
  %v208 = vunpack.c.l.b16 %v128
  %v209 = vunpack.c.l.b16 %v129
  %v210 = vunpack.c.l.b16 %v130
  %v211 = vunpack.c.l.b16 %v131
  %v212 = vunpack.c.l.b16 %v132
  %v213 = vunpack.c.l.b16 %v133
  %v214 = vunpack.c.l.b16 %v134
  %v215 = vunpack.c.l.b16 %v135
  %v216 = vpack.c.b16 %v201, %v200
  %v217 = vpack.c.b16 %v203, %v202
  %v218 = vpack.c.b16 %v205, %v204
  %v219 = vpack.c.b16 %v207, %v206
  %v220 = vpack.c.b16 %v209, %v208
  %v221 = vpack.c.b16 %v211, %v210
  %v222 = vpack.c.b16 %v213, %v212
  %v223 = vpack.c.b16 %v215, %v214
  %232 = vmatprep.subr.bf16.mxu0 0
  %233 = vmatpush1.bf16.msra.mxu0 %v216
  %234 = vmatprep.subr.bf16.mxu0 0
  %235 = vmatpush1.bf16.msra.mxu0 %v217
  %236 = vmatprep.subr.bf16.mxu0 0
  %237 = vmatpush1.bf16.msra.mxu0 %v218
  %238 = vmatprep.subr.bf16.mxu0 0
  %239 = vmatpush1.bf16.msra.mxu0 %v219
  %240 = vmatprep.subr.bf16.mxu0 0
  %241 = vmatpush1.bf16.msra.mxu0 %v220
  %242 = vmatprep.subr.bf16.mxu0 0
  %243 = vmatpush1.bf16.msra.mxu0 %v221
  %244 = vmatprep.subr.bf16.mxu0 0
  %245 = vmatpush1.bf16.msra.mxu0 %v222
  %246 = vmatprep.subr.bf16.mxu0 0
  %247 = vmatpush1.bf16.msra.mxu0 %v223
  %248 = vmatprep.subr.bf16.mxu0 0
  %249 = vmatpush1.bf16.msra.mxu0 0
  %250 = vmatprep.subr.bf16.mxu0 0
  %251 = vmatpush1.bf16.msra.mxu0 0
  %252 = vmatprep.subr.bf16.mxu0 0
  %253 = vmatpush1.bf16.msra.mxu0 0
  %254 = vmatprep.subr.bf16.mxu0 0
  %255 = vmatpush1.bf16.msra.mxu0 0
  %256 = vmatprep.subr.bf16.mxu0 0
  %257 = vmatpush1.bf16.msra.mxu0 0
  %258 = vmatprep.subr.bf16.mxu0 0
  %259 = vmatpush1.bf16.msra.mxu0 0
  %260 = vmatprep.subr.bf16.mxu0 0
  %261 = vmatpush1.bf16.msra.mxu0 0
  %262 = vmatprep.subr.bf16.mxu0 0
  %263 = vmatpush1.bf16.msra.mxu0 0
  %264 = vmatprep.mubr.bf16.mxu0 0
  %265 = vmatmul.mubr.bf16.gmra.mrb[0].mxu0 %v168
  %v266 = vpop.f32.mrb[0].mxu0
  %v267 = vadd.f32 0.0, %v266
  %v268 = vpop.f32.mrb[0].mxu0
  %v269 = vpop.f32.mrb[0].mxu0
  %v270 = vadd.f32 0.0, %v269
  %v271 = vpop.f32.mrb[0].mxu0
  %272 = vmatprep.mubr.bf16.mxu0 0
  %273 = vmatmul.mubr.bf16.gmra.mrb[0].mxu0 %v169
  %v274 = vpop.f32.mrb[0].mxu0
  %v275 = vadd.f32 0.0, %v274
  %v276 = vpop.f32.mrb[0].mxu0
  %v277 = vpop.f32.mrb[0].mxu0
  %v278 = vadd.f32 0.0, %v277
  %v279 = vpop.f32.mrb[0].mxu0
  %280 = vmatprep.mubr.bf16.mxu0 0
  %281 = vmatmul.mubr.bf16.gmra.mrb[0].mxu0 %v170
  %v282 = vpop.f32.mrb[0].mxu0
  %v283 = vadd.f32 0.0, %v282
  %v284 = vpop.f32.mrb[0].mxu0
  %v285 = vpop.f32.mrb[0].mxu0
  %v286 = vadd.f32 0.0, %v285
  %v287 = vpop.f32.mrb[0].mxu0
  %288 = vmatprep.mubr.bf16.mxu0 0
  %289 = vmatmul.mubr.bf16.gmra.mrb[0].mxu0 %v171
  %v290 = vpop.f32.mrb[0].mxu0
  %v291 = vadd.f32 0.0, %v290
  %v292 = vpop.f32.mrb[0].mxu0
  %v293 = vpop.f32.mrb[0].mxu0
  %v294 = vadd.f32 0.0, %v293
  %v295 = vpop.f32.mrb[0].mxu0
  %296 = vmatprep.mubr.bf16.mxu0 0
  %297 = vmatmul.mubr.bf16.gmra.mrb[0].mxu0 %v172
  %v298 = vpop.f32.mrb[0].mxu0
  %v299 = vadd.f32 0.0, %v298
  %v300 = vpop.f32.mrb[0].mxu0
  %v301 = vpop.f32.mrb[0].mxu0
  %v302 = vadd.f32 0.0, %v301
  %v303 = vpop.f32.mrb[0].mxu0
  %304 = vmatprep.mubr.bf16.mxu0 0
  %305 = vmatmul.mubr.bf16.gmra.mrb[0].mxu0 %v173
  %v306 = vpop.f32.mrb[0].mxu0
  %v307 = vadd.f32 0.0, %v306
  %v308 = vpop.f32.mrb[0].mxu0
  %v309 = vpop.f32.mrb[0].mxu0
  %v310 = vadd.f32 0.0, %v309
  %v311 = vpop.f32.mrb[0].mxu0
  %312 = vmatprep.mubr.bf16.mxu0 0
  %313 = vmatmul.mubr.bf16.gmra.mrb[0].mxu0 %v174
  %v314 = vpop.f32.mrb[0].mxu0
  %v315 = vadd.f32 0.0, %v314
  %v316 = vpop.f32.mrb[0].mxu0
  %v317 = vpop.f32.mrb[0].mxu0
  %v318 = vadd.f32 0.0, %v317
  %v319 = vpop.f32.mrb[0].mxu0
  %320 = vmatprep.mubr.bf16.mxu0 0
  %321 = vmatmul.mubr.bf16.gmra.mrb[0].mxu0 %v175
  %v322 = vpop.f32.mrb[0].mxu0
  %v323 = vadd.f32 0.0, %v322
  %v324 = vpop.f32.mrb[0].mxu0
  %v325 = vpop.f32.mrb[0].mxu0
  %v326 = vadd.f32 0.0, %v325
  %v327 = vpop.f32.mrb[0].mxu0
  %328 = vdwg.mxu0
  %v329 = vld [vmem:[%s76] sm:$0xf]
  %v330 = vld [vmem:[%s76 + $0x4] sm:$0xf]
  %v331 = vld [vmem:[%s76 + $0x8] sm:$0xf]
  %v332 = vld [vmem:[%s76 + $0xc] sm:$0xf]
  %v333 = vld [vmem:[%s76 + $0x10] sm:$0xf]
  %v334 = vld [vmem:[%s76 + $0x14] sm:$0xf]
  %v335 = vld [vmem:[%s76 + $0x18] sm:$0xf]
  %v336 = vld [vmem:[%s76 + $0x1c] sm:$0xf]
  %v337 = vld [vmem:[%s76 + $0x20] sm:$0xf]
  %v338 = vld [vmem:[%s76 + $0x24] sm:$0xf]
  %v339 = vld [vmem:[%s76 + $0x28] sm:$0xf]
  %v340 = vld [vmem:[%s76 + $0x2c] sm:$0xf]
  %v341 = vld [vmem:[%s76 + $0x30] sm:$0xf]
  %v342 = vld [vmem:[%s76 + $0x34] sm:$0xf]
  %v343 = vld [vmem:[%s76 + $0x38] sm:$0xf]
  %v344 = vld [vmem:[%s76 + $0x3c] sm:$0xf]
  %v345 = vld [vmem:[%s3] sm:$0xf]
  %v346 = vld [vmem:[%s3 + $0x4] sm:$0xf]
  %v347 = vld [vmem:[%s3 + $0x8] sm:$0xf]
  %v348 = vld [vmem:[%s3 + $0xc] sm:$0xf]
  %v349 = vld [vmem:[%s3 + $0x10] sm:$0xf]
  %v350 = vld [vmem:[%s3 + $0x14] sm:$0xf]
  %v351 = vld [vmem:[%s3 + $0x18] sm:$0xf]
  %v352 = vld [vmem:[%s3 + $0x1c] sm:$0xf]
  %v353 = vld [vmem:[%s3 + $0x20] sm:$0xf]
  %v354 = vld [vmem:[%s3 + $0x24] sm:$0xf]
  %v355 = vld [vmem:[%s3 + $0x28] sm:$0xf]
  %v356 = vld [vmem:[%s3 + $0x2c] sm:$0xf]
  %v357 = vld [vmem:[%s3 + $0x30] sm:$0xf]
  %v358 = vld [vmem:[%s3 + $0x34] sm:$0xf]
  %v359 = vld [vmem:[%s3 + $0x38] sm:$0xf]
  %v360 = vld [vmem:[%s3 + $0x3c] sm:$0xf]
  %v377 = vunpack.c.l.b16 %v329
  %v378 = vunpack.c.l.b16 %v330
  %v379 = vunpack.c.l.b16 %v331
  %v380 = vunpack.c.l.b16 %v332
  %v381 = vunpack.c.l.b16 %v333
  %v382 = vunpack.c.l.b16 %v334
  %v383 = vunpack.c.l.b16 %v335
  %v384 = vunpack.c.l.b16 %v336
  %v385 = vunpack.c.l.b16 %v337
  %v386 = vunpack.c.l.b16 %v338
  %v387 = vunpack.c.l.b16 %v339
  %v388 = vunpack.c.l.b16 %v340
  %v389 = vunpack.c.l.b16 %v341
  %v390 = vunpack.c.l.b16 %v342
  %v391 = vunpack.c.l.b16 %v343
  %v392 = vunpack.c.l.b16 %v344
  %v393 = vpack.c.b16 %v378, %v377
  %v394 = vpack.c.b16 %v380, %v379
  %v395 = vpack.c.b16 %v382, %v381
  %v396 = vpack.c.b16 %v384, %v383
  %v397 = vpack.c.b16 %v386, %v385
  %v398 = vpack.c.b16 %v388, %v387
  %v399 = vpack.c.b16 %v390, %v389
  %v400 = vpack.c.b16 %v392, %v391
  %v425 = vunpack.c.l.b16 %v345
  %v426 = vunpack.c.l.b16 %v346
  %v427 = vunpack.c.l.b16 %v347
  %v428 = vunpack.c.l.b16 %v348
  %v429 = vunpack.c.l.b16 %v349
  %v430 = vunpack.c.l.b16 %v350
  %v431 = vunpack.c.l.b16 %v351
  %v432 = vunpack.c.l.b16 %v352
  %v433 = vunpack.c.l.b16 %v353
  %v434 = vunpack.c.l.b16 %v354
  %v435 = vunpack.c.l.b16 %v355
  %v436 = vunpack.c.l.b16 %v356
  %v437 = vunpack.c.l.b16 %v357
  %v438 = vunpack.c.l.b16 %v358
  %v439 = vunpack.c.l.b16 %v359
  %v440 = vunpack.c.l.b16 %v360
  %v441 = vpack.c.b16 %v426, %v425
  %v442 = vpack.c.b16 %v428, %v427
  %v443 = vpack.c.b16 %v430, %v429
  %v444 = vpack.c.b16 %v432, %v431
  %v445 = vpack.c.b16 %v434, %v433
  %v446 = vpack.c.b16 %v436, %v435
  %v447 = vpack.c.b16 %v438, %v437
  %v448 = vpack.c.b16 %v440, %v439
  %457 = vmatprep.subr.bf16.mxu0 0
  %458 = vmatpush1.bf16.msra.mxu0 %v441
  %459 = vmatprep.subr.bf16.mxu0 0
  %460 = vmatpush1.bf16.msra.mxu0 %v442
  %461 = vmatprep.subr.bf16.mxu0 0
  %462 = vmatpush1.bf16.msra.mxu0 %v443
  %463 = vmatprep.subr.bf16.mxu0 0
  %464 = vmatpush1.bf16.msra.mxu0 %v444
  %465 = vmatprep.subr.bf16.mxu0 0
  %466 = vmatpush1.bf16.msra.mxu0 %v445
  %467 = vmatprep.subr.bf16.mxu0 0
  %468 = vmatpush1.bf16.msra.mxu0 %v446
  %469 = vmatprep.subr.bf16.mxu0 0
  %470 = vmatpush1.bf16.msra.mxu0 %v447
  %471 = vmatprep.subr.bf16.mxu0 0
  %472 = vmatpush1.bf16.msra.mxu0 %v448
  %473 = vmatprep.subr.bf16.mxu0 0
  %474 = vmatpush1.bf16.msra.mxu0 0
  %475 = vmatprep.subr.bf16.mxu0 0
  %476 = vmatpush1.bf16.msra.mxu0 0
  %477 = vmatprep.subr.bf16.mxu0 0
  %478 = vmatpush1.bf16.msra.mxu0 0
  %479 = vmatprep.subr.bf16.mxu0 0
  %480 = vmatpush1.bf16.msra.mxu0 0
  %481 = vmatprep.subr.bf16.mxu0 0
  %482 = vmatpush1.bf16.msra.mxu0 0
  %483 = vmatprep.subr.bf16.mxu0 0
  %484 = vmatpush1.bf16.msra.mxu0 0
  %485 = vmatprep.subr.bf16.mxu0 0
  %486 = vmatpush1.bf16.msra.mxu0 0
  %487 = vmatprep.subr.bf16.mxu0 0
  %488 = vmatpush1.bf16.msra.mxu0 0
  %489 = vmatprep.mubr.bf16.mxu0 0
  %490 = vmatmul.mubr.bf16.gmra.mrb[0].mxu0 %v393
  %v491 = vpop.f32.mrb[0].mxu0
  %v492 = vadd.f32 0.0, %v491
  %v493 = vpop.f32.mrb[0].mxu0
  %v494 = vpop.f32.mrb[0].mxu0
  %v495 = vadd.f32 0.0, %v494
  %v496 = vpop.f32.mrb[0].mxu0
  %497 = vmatprep.mubr.bf16.mxu0 0
  %498 = vmatmul.mubr.bf16.gmra.mrb[0].mxu0 %v394
  %v499 = vpop.f32.mrb[0].mxu0
  %v500 = vadd.f32 0.0, %v499
  %v501 = vpop.f32.mrb[0].mxu0
  %v502 = vpop.f32.mrb[0].mxu0
  %v503 = vadd.f32 0.0, %v502
  %v504 = vpop.f32.mrb[0].mxu0
  %505 = vmatprep.mubr.bf16.mxu0 0
  %506 = vmatmul.mubr.bf16.gmra.mrb[0].mxu0 %v395
  %v507 = vpop.f32.mrb[0].mxu0
  %v508 = vadd.f32 0.0, %v507
  %v509 = vpop.f32.mrb[0].mxu0
  %v510 = vpop.f32.mrb[0].mxu0
  %v511 = vadd.f32 0.0, %v510
  %v512 = vpop.f32.mrb[0].mxu0
  %513 = vmatprep.mubr.bf16.mxu0 0
  %514 = vmatmul.mubr.bf16.gmra.mrb[0].mxu0 %v396
  %v515 = vpop.f32.mrb[0].mxu0
  %v516 = vadd.f32 0.0, %v515
  %v517 = vpop.f32.mrb[0].mxu0
  %v518 = vpop.f32.mrb[0].mxu0
  %v519 = vadd.f32 0.0, %v518
  %v520 = vpop.f32.mrb[0].mxu0
  %521 = vmatprep.mubr.bf16.mxu0 0
  %522 = vmatmul.mubr.bf16.gmra.mrb[0].mxu0 %v397
  %v523 = vpop.f32.mrb[0].mxu0
  %v524 = vadd.f32 0.0, %v523
  %v525 = vpop.f32.mrb[0].mxu0
  %v526 = vpop.f32.mrb[0].mxu0
  %v527 = vadd.f32 0.0, %v526
  %v528 = vpop.f32.mrb[0].mxu0
  %529 = vmatprep.mubr.bf16.mxu0 0
  %530 = vmatmul.mubr.bf16.gmra.mrb[0].mxu0 %v398
  %v531 = vpop.f32.mrb[0].mxu0
  %v532 = vadd.f32 0.0, %v531
  %v533 = vpop.f32.mrb[0].mxu0
  %v534 = vpop.f32.mrb[0].mxu0
  %v535 = vadd.f32 0.0, %v534
  %v536 = vpop.f32.mrb[0].mxu0
  %537 = vmatprep.mubr.bf16.mxu0 0
  %538 = vmatmul.mubr.bf16.gmra.mrb[0].mxu0 %v399
  %v539 = vpop.f32.mrb[0].mxu0
  %v540 = vadd.f32 0.0, %v539
  %v541 = vpop.f32.mrb[0].mxu0
  %v542 = vpop.f32.mrb[0].mxu0
  %v543 = vadd.f32 0.0, %v542
  %v544 = vpop.f32.mrb[0].mxu0
  %545 = vmatprep.mubr.bf16.mxu0 0
  %546 = vmatmul.mubr.bf16.gmra.mrb[0].mxu0 %v400
  %v547 = vpop.f32.mrb[0].mxu0
  %v548 = vadd.f32 0.0, %v547
  %v549 = vpop.f32.mrb[0].mxu0
  %v550 = vpop.f32.mrb[0].mxu0
  %v551 = vadd.f32 0.0, %v550
  %v552 = vpop.f32.mrb[0].mxu0
  %553 = vdwg.mxu0
  %v554 = vpack.c.bf16 %v270, %v267
  %v555 = vpack.c.bf16 %v278, %v275
  %v556 = vpack.c.bf16 %v286, %v283
  %v557 = vpack.c.bf16 %v294, %v291
  %v558 = vpack.c.bf16 %v302, %v299
  %v559 = vpack.c.bf16 %v310, %v307
  %v560 = vpack.c.bf16 %v318, %v315
  %v561 = vpack.c.bf16 %v326, %v323
  %v570 = vunpack.c.l.b16 %v554
  %v571 = vunpack.c.h.b16 %v554
  %v572 = vunpack.c.l.b16 %v555
  %v573 = vunpack.c.h.b16 %v555
  %v574 = vunpack.c.l.b16 %v556
  %v575 = vunpack.c.h.b16 %v556
  %v576 = vunpack.c.l.b16 %v557
  %v577 = vunpack.c.h.b16 %v557
  %v578 = vunpack.c.l.b16 %v558
  %v579 = vunpack.c.h.b16 %v558
  %v580 = vunpack.c.l.b16 %v559
  %v581 = vunpack.c.h.b16 %v559
  %v582 = vunpack.c.l.b16 %v560
  %v583 = vunpack.c.h.b16 %v560
  %v584 = vunpack.c.l.b16 %v561
  %v585 = vunpack.c.h.b16 %v561
  %v586 = vpack.c.b16 %v570, %v570
  %v587 = vpack.c.b16 %v571, %v571
  %v588 = vpack.c.b16 %v572, %v572
  %v589 = vpack.c.b16 %v573, %v573
  %v590 = vpack.c.b16 %v574, %v574
  %v591 = vpack.c.b16 %v575, %v575
  %v592 = vpack.c.b16 %v576, %v576
  %v593 = vpack.c.b16 %v577, %v577
  %v594 = vpack.c.b16 %v578, %v578
  %v595 = vpack.c.b16 %v579, %v579
  %v596 = vpack.c.b16 %v580, %v580
  %v597 = vpack.c.b16 %v581, %v581
  %v598 = vpack.c.b16 %v582, %v582
  %v599 = vpack.c.b16 %v583, %v583
  %v600 = vpack.c.b16 %v584, %v584
  %v601 = vpack.c.b16 %v585, %v585
  %618 = vst [vmem:[%s84] sm:$0xf] %v586
  %619 = vst [vmem:[%s84 + $0x4] sm:$0xf] %v587
  %620 = vst [vmem:[%s84 + $0x8] sm:$0xf] %v588
  %621 = vst [vmem:[%s84 + $0xc] sm:$0xf] %v589
  %622 = vst [vmem:[%s84 + $0x10] sm:$0xf] %v590
  %623 = vst [vmem:[%s84 + $0x14] sm:$0xf] %v591
  %624 = vst [vmem:[%s84 + $0x18] sm:$0xf] %v592
  %625 = vst [vmem:[%s84 + $0x1c] sm:$0xf] %v593
  %626 = vst [vmem:[%s84 + $0x20] sm:$0xf] %v594
  %627 = vst [vmem:[%s84 + $0x24] sm:$0xf] %v595
  %628 = vst [vmem:[%s84 + $0x28] sm:$0xf] %v596
  %629 = vst [vmem:[%s84 + $0x2c] sm:$0xf] %v597
  %630 = vst [vmem:[%s84 + $0x30] sm:$0xf] %v598
  %631 = vst [vmem:[%s84 + $0x34] sm:$0xf] %v599
  %632 = vst [vmem:[%s84 + $0x38] sm:$0xf] %v600
  %633 = vst [vmem:[%s84 + $0x3c] sm:$0xf] %v601
  %v634 = vpack.c.bf16 %v495, %v492
  %v635 = vpack.c.bf16 %v503, %v500
  %v636 = vpack.c.bf16 %v511, %v508
  %v637 = vpack.c.bf16 %v519, %v516
  %v638 = vpack.c.bf16 %v527, %v524
  %v639 = vpack.c.bf16 %v535, %v532
  %v640 = vpack.c.bf16 %v543, %v540
  %v641 = vpack.c.bf16 %v551, %v548
  %v650 = vunpack.c.l.b16 %v634
  %v651 = vunpack.c.h.b16 %v634
  %v652 = vunpack.c.l.b16 %v635
  %v653 = vunpack.c.h.b16 %v635
  %v654 = vunpack.c.l.b16 %v636
  %v655 = vunpack.c.h.b16 %v636
  %v656 = vunpack.c.l.b16 %v637
  %v657 = vunpack.c.h.b16 %v637
  %v658 = vunpack.c.l.b16 %v638
  %v659 = vunpack.c.h.b16 %v638
  %v660 = vunpack.c.l.b16 %v639
  %v661 = vunpack.c.h.b16 %v639
  %v662 = vunpack.c.l.b16 %v640
  %v663 = vunpack.c.h.b16 %v640
  %v664 = vunpack.c.l.b16 %v641
  %v665 = vunpack.c.h.b16 %v641
  %v666 = vpack.c.b16 %v650, %v650
  %v667 = vpack.c.b16 %v651, %v651
  %v668 = vpack.c.b16 %v652, %v652
  %v669 = vpack.c.b16 %v653, %v653
  %v670 = vpack.c.b16 %v654, %v654
  %v671 = vpack.c.b16 %v655, %v655
  %v672 = vpack.c.b16 %v656, %v656
  %v673 = vpack.c.b16 %v657, %v657
  %v674 = vpack.c.b16 %v658, %v658
  %v675 = vpack.c.b16 %v659, %v659
  %v676 = vpack.c.b16 %v660, %v660
  %v677 = vpack.c.b16 %v661, %v661
  %v678 = vpack.c.b16 %v662, %v662
  %v679 = vpack.c.b16 %v663, %v663
  %v680 = vpack.c.b16 %v664, %v664
  %v681 = vpack.c.b16 %v665, %v665
  %698 = vst [vmem:[%s92] sm:$0xf] %v666
  %699 = vst [vmem:[%s92 + $0x4] sm:$0xf] %v667
  %700 = vst [vmem:[%s92 + $0x8] sm:$0xf] %v668
  %701 = vst [vmem:[%s92 + $0xc] sm:$0xf] %v669
  %702 = vst [vmem:[%s92 + $0x10] sm:$0xf] %v670
  %703 = vst [vmem:[%s92 + $0x14] sm:$0xf] %v671
  %704 = vst [vmem:[%s92 + $0x18] sm:$0xf] %v672
  %705 = vst [vmem:[%s92 + $0x1c] sm:$0xf] %v673
  %706 = vst [vmem:[%s92 + $0x20] sm:$0xf] %v674
  %707 = vst [vmem:[%s92 + $0x24] sm:$0xf] %v675
  %708 = vst [vmem:[%s92 + $0x28] sm:$0xf] %v676
  %709 = vst [vmem:[%s92 + $0x2c] sm:$0xf] %v677
  %710 = vst [vmem:[%s92 + $0x30] sm:$0xf] %v678
  %711 = vst [vmem:[%s92 + $0x34] sm:$0xf] %v679
  %712 = vst [vmem:[%s92 + $0x38] sm:$0xf] %v680
  %713 = vst [vmem:[%s92 + $0x3c] sm:$0xf] %v681
  %v714 = vld [vmem:[%s6] sm:$0xff]
  %v715 = vadd.f32 %v267, %v270
  %v716 = vadd.f32 %v715, %v275
  %v717 = vadd.f32 %v716, %v278
  %v718 = vadd.f32 %v717, %v283
  %v719 = vadd.f32 %v718, %v286
  %v720 = vadd.f32 %v719, %v291
  %v721 = vadd.f32 %v720, %v294
  %v722 = vadd.f32 %v721, %v299
  %v723 = vadd.f32 %v722, %v302
  %v724 = vadd.f32 %v723, %v307
  %v725 = vadd.f32 %v724, %v310
  %v726 = vadd.f32 %v725, %v315
  %v727 = vadd.f32 %v726, %v318
  %v728 = vadd.f32 %v727, %v323
  %v729 = vadd.f32 %v728, %v326
  %v730 = vadd.f32 %v714, %v729
  %731 = vst [vmem:[%s6] sm:$0xff] %v730
  %v732 = vld [vmem:[%s7] sm:$0xff]
  %v733 = vmul.f32 %v267, %v267
  %v734 = vmul.f32 %v270, %v270
  %v735 = vmul.f32 %v275, %v275
  %v736 = vmul.f32 %v278, %v278
  %v737 = vmul.f32 %v283, %v283
  %v738 = vmul.f32 %v286, %v286
  %v739 = vmul.f32 %v291, %v291
  %v740 = vmul.f32 %v294, %v294
  %v741 = vmul.f32 %v299, %v299
  %v742 = vmul.f32 %v302, %v302
  %v743 = vmul.f32 %v307, %v307
  %v744 = vmul.f32 %v310, %v310
  %v745 = vmul.f32 %v315, %v315
  %v746 = vmul.f32 %v318, %v318
  %v747 = vmul.f32 %v323, %v323
  %v748 = vmul.f32 %v326, %v326
  %v749 = vadd.f32 %v733, %v734
  %v750 = vadd.f32 %v749, %v735
  %v751 = vadd.f32 %v750, %v736
  %v752 = vadd.f32 %v751, %v737
  %v753 = vadd.f32 %v752, %v738
  %v754 = vadd.f32 %v753, %v739
  %v755 = vadd.f32 %v754, %v740
  %v756 = vadd.f32 %v755, %v741
  %v757 = vadd.f32 %v756, %v742
  %v758 = vadd.f32 %v757, %v743
  %v759 = vadd.f32 %v758, %v744
  %v760 = vadd.f32 %v759, %v745
  %v761 = vadd.f32 %v760, %v746
  %v762 = vadd.f32 %v761, %v747
  %v763 = vadd.f32 %v762, %v748
  %v764 = vadd.f32 %v732, %v763
  %765 = vst [vmem:[%s7] sm:$0xff] %v764
  %v766 = vld [vmem:[%s8] sm:$0xff]
  %v767 = vadd.f32 %v492, %v495
  %v768 = vadd.f32 %v767, %v500
  %v769 = vadd.f32 %v768, %v503
  %v770 = vadd.f32 %v769, %v508
  %v771 = vadd.f32 %v770, %v511
  %v772 = vadd.f32 %v771, %v516
  %v773 = vadd.f32 %v772, %v519
  %v774 = vadd.f32 %v773, %v524
  %v775 = vadd.f32 %v774, %v527
  %v776 = vadd.f32 %v775, %v532
  %v777 = vadd.f32 %v776, %v535
  %v778 = vadd.f32 %v777, %v540
  %v779 = vadd.f32 %v778, %v543
  %v780 = vadd.f32 %v779, %v548
  %v781 = vadd.f32 %v780, %v551
  %v782 = vadd.f32 %v766, %v781
  %783 = vst [vmem:[%s8] sm:$0xff] %v782
  %v784 = vld [vmem:[%s9] sm:$0xff]
  %v785 = vmul.f32 %v492, %v492
  %v786 = vmul.f32 %v495, %v495
  %v787 = vmul.f32 %v500, %v500
  %v788 = vmul.f32 %v503, %v503
  %v789 = vmul.f32 %v508, %v508
  %v790 = vmul.f32 %v511, %v511
  %v791 = vmul.f32 %v516, %v516
  %v792 = vmul.f32 %v519, %v519
  %v793 = vmul.f32 %v524, %v524
  %v794 = vmul.f32 %v527, %v527
  %v795 = vmul.f32 %v532, %v532
  %v796 = vmul.f32 %v535, %v535
  %v797 = vmul.f32 %v540, %v540
  %v798 = vmul.f32 %v543, %v543
  %v799 = vmul.f32 %v548, %v548
  %v800 = vmul.f32 %v551, %v551
  %v801 = vadd.f32 %v785, %v786
  %v802 = vadd.f32 %v801, %v787
  %v803 = vadd.f32 %v802, %v788
  %v804 = vadd.f32 %v803, %v789
  %v805 = vadd.f32 %v804, %v790
  %v806 = vadd.f32 %v805, %v791
  %v807 = vadd.f32 %v806, %v792
  %v808 = vadd.f32 %v807, %v793
  %v809 = vadd.f32 %v808, %v794
  %v810 = vadd.f32 %v809, %v795
  %v811 = vadd.f32 %v810, %v796
  %v812 = vadd.f32 %v811, %v797
  %v813 = vadd.f32 %v812, %v798
  %v814 = vadd.f32 %v813, %v799
  %v815 = vadd.f32 %v814, %v800
  %v816 = vadd.f32 %v784, %v815
  %817 = vst [vmem:[%s9] sm:$0xff] %v816
  %s818 = sadd.s32 0, 0
  %s819 = smul.u32 16, %s818
  %p820 = scmp.lt.s32.totalorder %s819, 15
  %s821 = scalar_select %p820, %s819, 15
  %s822 = smul.addr %s821, 4
  %s823 = scalar_lea.vmem %s4, %s822
  %s824 = sadd.s32 0, 0
  %s825 = smul.u32 16, %s824
  %p826 = scmp.lt.s32.totalorder %s825, 15
  %s827 = scalar_select %p826, %s825, 15
  %s828 = smul.addr %s827, 4
  %s829 = scalar_lea.vmem %s5, %s828
  // Predicated region
  $region22: #{basic_block_forward.6} parent=0 // pred_check
    _
  $region23: #{basic_block_forward.6} parent=0 // pred_check_branch
    %831 = sbr.rel (0) target = $region25
  $region24: #{basic_block_forward.6} parent=0 // pred_region
    %s832 = sadd.s32 0, 0
    %s833 = smul.u32 16, %s832
  $region25: #{basic_block_forward.6} parent=0 // pred_fallthru
    _
  // Predicated region
  $region26: #{basic_block_forward.6} parent=0 // pred_check
    _
  $region27: #{basic_block_forward.6} parent=0 // pred_check_branch
    %835 = sbr.rel (0) target = $region29
  $region28: #{basic_block_forward.6} parent=0 // pred_region
    %s836 = sadd.s32 0, 0
    %s837 = smul.u32 16, %s836
  $region29: #{basic_block_forward.6} parent=0 // pred_fallthru
    _
  // Predicated region
  $region30: #{basic_block_forward.6} parent=0 // pred_check
    _
  $region31: #{basic_block_forward.6} parent=0 // pred_check_branch
    %839 = sbr.rel (0) target = $region33
  $region32: #{basic_block_forward.6} parent=0 // pred_region
    _
  $region33: #{basic_block_forward.6} parent=0 // pred_fallthru
    _
  // Predicated region
  $region34: #{basic_block_forward.6} parent=0 // pred_check
    _
  $region35: #{basic_block_forward.6} parent=0 // pred_check_branch
    %841 = sbr.rel (0) target = $region37
  $region36: #{basic_block_forward.6} parent=0 // pred_region
    _
  $region37: #{basic_block_forward.6} parent=0 // pred_fallthru
    _
  // Predicated region
  $region38: #{basic_block_forward.6} parent=0 // pred_check
    _
  $region39: #{basic_block_forward.6} parent=0 // pred_check_branch
    %843 = sbr.rel (0) target = $region41
  $region40: #{basic_block_forward.6} parent=0 // pred_region
    _
  $region41: #{basic_block_forward.6} parent=0 // pred_fallthru
    _
  // Predicated region
  $region42: #{basic_block_forward.6} parent=0 // pred_check
    _
  $region43: #{basic_block_forward.6} parent=0 // pred_check_branch
    %845 = sbr.rel (0) target = $region45
  $region44: #{basic_block_forward.6} parent=0 // pred_region
    _
  $region45: #{basic_block_forward.6} parent=0 // pred_fallthru
    _
  // Predicated region
  $region46: #{basic_block_forward.6} parent=0 // pred_check
    _
  $region47: #{basic_block_forward.6} parent=0 // pred_check_branch
    %847 = sbr.rel (0) target = $region49
  $region48: #{basic_block_forward.6} parent=0 // pred_region
    %s848 = sadd.s32 0, 0
    %s849 = smul.u32 16, %s848
    %p850 = scmp.lt.s32.totalorder %s849, 15
    %s851 = scalar_select %p850, %s849, 15
    %s852 = smul.addr %s851, 4
    %s853 = scalar_lea.vmem %s4, %s852
  $region49: #{basic_block_forward.6} parent=0 // pred_fallthru
    _
  // Predicated region
  $region50: #{basic_block_forward.6} parent=0 // pred_check
    _
  $region51: #{basic_block_forward.6} parent=0 // pred_check_branch
    %855 = sbr.rel (0) target = $region53
  $region52: #{basic_block_forward.6} parent=0 // pred_region
    %s856 = sadd.s32 0, 0
    %s857 = smul.u32 16, %s856
    %p858 = scmp.lt.s32.totalorder %s857, 15
    %s859 = scalar_select %p858, %s857, 15
    %s860 = smul.addr %s859, 4
    %s861 = scalar_lea.vmem %s5, %s860
  $region53: #{basic_block_forward.6} parent=0 // pred_fallthru
    _
  // Predicated region
  $region54: #{basic_block_forward.6} parent=0 // pred_check
    _
  $region55: #{basic_block_forward.6} parent=0 // pred_check_branch
    %863 = sbr.rel (0) target = $region57
  $region56: #{basic_block_forward.6} parent=0 // pred_region
    _
  $region57: #{basic_block_forward.6} parent=0 // pred_fallthru
    _
  // Predicated region
  $region58: #{basic_block_forward.6} parent=0 // pred_check
    _
  $region59: #{basic_block_forward.6} parent=0 // pred_check_branch
    %865 = sbr.rel (0) target = $region61
  $region60: #{basic_block_forward.6} parent=0 // pred_region
    _
  $region61: #{basic_block_forward.6} parent=0 // pred_fallthru
    _
  // Predicated region
  $region62: #{basic_block_forward.6} parent=0 // pred_check
    _
  $region63: #{basic_block_forward.6} parent=0 // pred_check_branch
    %867 = sbr.rel (0) target = $region65
  $region64: #{basic_block_forward.6} parent=0 // pred_region
    _
  $region65: #{basic_block_forward.6} parent=0 // pred_fallthru
    _
  // Predicated region
  $region66: #{basic_block_forward.6} parent=0 // pred_check
    _
  $region67: #{basic_block_forward.6} parent=0 // pred_check_branch
    %869 = sbr.rel (0) target = $region69
  $region68: #{basic_block_forward.6} parent=0 // pred_region
    _
  $region69: #{basic_block_forward.6} parent=0 // pred_fallthru
    _

</llo_original>
